<compile_context>
chip_gen: v7x
topology: tpu7x:2x2x1
jax: 0.10.0
libtpu: 0.0.40
codegen_flags: <defaults>
</compile_context>

<pallas_src>
import functools
import math

import jax
import jax.numpy as jnp
from jax import lax
from jax.experimental import pallas as pl
from jax.experimental.pallas import tpu as pltpu


_NEG_BIG = -1e30      # finite "masked" score: no (-inf) - (-inf) NaNs in the online softmax
_LN_EPS = 1e-5


def _layernorm(x, scale, bias, eps=_LN_EPS):
    # Matches the custom PyTorch LayerNorm: population std, eps added to the *std*.
    mean = jnp.mean(x, axis=-1, keepdims=True)
    var = jnp.mean((x - mean) ** 2, axis=-1, keepdims=True)
    return (x - mean) / (jnp.sqrt(var) + eps) * scale + bias


def _gelu_exact(x):
    # nn.GELU() default: exact erf-based GELU (kept exact to match the PyTorch module;
    # tanh-approx would move the nonlinearity to the EUP if the epilogue ever VALU-binds).
    return 0.5 * x * (1.0 + lax.erf(x * (1.0 / math.sqrt(2.0))))


# ---------------------------------------------------------------------------------------
# Kernel 1: LN1 + fused QKV projection (once per token).
# ---------------------------------------------------------------------------------------
def _qkv_prologue_kernel(x_ref, ln1_s_ref, ln1_b_ref, wqkv_ref, qkv_ref):
    h1 = _layernorm(x_ref[0], ln1_s_ref[0], ln1_b_ref[0]).astype(jnp.bfloat16)
    qkv_ref[0] = jnp.dot(h1, wqkv_ref[...],
                         preferred_element_type=jnp.float32).astype(jnp.bfloat16)


# ---------------------------------------------------------------------------------------
# Kernel 2: flash attention over a triangular (qi, kv) schedule + fused block epilogue.
# ---------------------------------------------------------------------------------------
def _flash_block_kernel(
        qi_sched_ref, kv_sched_ref,                          # scalar-prefetched schedule
        xq_ref, q_ref, kt_ref, v_ref,                        # x residual tile, Q, K^T, V
        wp_hm_ref, bp_ref, ln2_s_ref, ln2_b_ref,
        w1_ref, b1_ref, w2_ref, b2_ref,
        o_ref,
        m_scr, l_scr, acc_scr,
        *, num_heads, tq, tkv):
    step = pl.program_id(1)
    qi = qi_sched_ref[step]
    kv = kv_sched_ref[step]
    C = xq_ref.shape[-1]
    H = num_heads
    bf16 = jnp.bfloat16

    # -- first kv tile of this query tile: reset the online-softmax state --
    @pl.when(kv == 0)
    def _init():
        m_scr[...] = jnp.full(m_scr.shape, _NEG_BIG, jnp.float32)
        l_scr[...] = jnp.zeros(l_scr.shape, jnp.float32)
        acc_scr[...] = jnp.zeros(acc_scr.shape, jnp.float32)

    # -- every schedule step is a live (kv <= qi) tile: online-softmax update --
    # K arrives pre-transposed (H, hd, tkv): scores are a natural batched [tq,hd]x[hd,tkv].
    s_blk = lax.dot_general(q_ref[0], kt_ref[0],
                            dimension_numbers=(((2,), (1,)), ((0,), (0,))),
                            preferred_element_type=jnp.float32)          # (H, tq, tkv)

    row = qi * tq + lax.broadcasted_iota(jnp.int32, (tq, tkv), 0)
    col = kv * tkv + lax.broadcasted_iota(jnp.int32, (tq, tkv), 1)
    s_blk = jnp.where((col <= row)[None, :, :], s_blk, _NEG_BIG)

    m_prev = m_scr[...]
    m_new = jnp.maximum(m_prev, jnp.max(s_blk, axis=-1, keepdims=True))  # (H, tq, 1)
    alpha = jnp.exp(m_prev - m_new)
    p = jnp.exp(s_blk - m_new)
    l_scr[...] = alpha * l_scr[...] + jnp.sum(p, axis=-1, keepdims=True)
    acc_scr[...] = alpha * acc_scr[...] + lax.dot_general(
        p.astype(bf16), v_ref[0],
        dimension_numbers=(((2,), (1,)), ((0,), (0,))),
        preferred_element_type=jnp.float32)                               # (H, tq, hd)
    m_scr[...] = m_new

    # -- diagonal tile (last kv step of this query tile): finish attention, FF, residuals --
    @pl.when(kv == qi)
    def _finalize():
        inv_l = pl.reciprocal(l_scr[...], approx=False)   # exact: denom error would dominate
        attn = (acc_scr[...] * inv_l).astype(bf16)        # (H, tq, hd)

        # Output projection with head-major wp (H, hd, C): per-head [tq,hd]x[hd,C] dots
        # summed into (tq, C).  Same total MXU flops as concat + one big dot, but no lane
        # relayout of the accumulator (runs once per query tile, not in the kv loop).
        proj = jnp.zeros((tq, C), jnp.float32)
        for h in range(H):
            proj = proj + jnp.dot(attn[h], wp_hm_ref[h],
                                  preferred_element_type=jnp.float32)
        x1 = xq_ref[0] + proj + bp_ref[0]                 # residual 1 (resid_dropout1 = id)

        # TODO(synk): for large C on v7x (64 MiB VMEM), stream w1/w2 over the 4C hidden dim
        # (extra reduction grid axis or a separate pallas_call) instead of keeping the full
        # FF weights resident in VMEM.
        h2 = _layernorm(x1, ln2_s_ref[0], ln2_b_ref[0]).astype(bf16)
        ff = jnp.dot(h2, w1_ref[...], preferred_element_type=jnp.float32) + b1_ref[0]
        ff = _gelu_exact(ff)
        ff = jnp.dot(ff.astype(bf16), w2_ref[...],
                     preferred_element_type=jnp.float32) + b2_ref[0]
        o_ref[0] = (x1 + ff).astype(o_ref.dtype)          # residual 2 (resid_dropout2 = id)


def _vmem_limit_bytes(estimate):
    """Per-config VMEM budget with conservative hardware fallback (v7x = 64 MiB)."""
    try:
        cap = int(getattr(pltpu.get_tpu_info(), "vmem_capacity_bytes", 64 * 1024 * 1024))
    except Exception:
        cap = 64 * 1024 * 1024
    ceiling = cap - 8 * 1024 * 1024       # headroom for compiler-internal scratch
    return int(min(max(estimate, 32 * 1024 * 1024), ceiling))


def transformer_block(x, params, num_heads, *, tq=None):
    B, T, C = x.shape
    H = num_heads
    assert C % H == 0, "d_out must be divisible by num_heads"
    hd = C // H
    if tq is None:
        # 128/256-aligned tiles fill the MXU; keep <= 256 so (H, tq, tkv) temporaries stay
        # bounded on v7x (on v6e, larger tq can be passed explicitly to use its 128 MiB VMEM).
        tq = 256 if T % 256 == 0 else (128 if T % 128 == 0 else T)
    tq = min(tq, T)
    assert T % tq == 0, "sequence length must be divisible by the query tile"
    # K is streamed pre-transposed (B, H, hd, T); its kv tile lives in the lane dimension.
    assert tq % 128 == 0 or tq == T, "tq must be a multiple of 128 (or the full T)"
    tkv = tq
    nq = T // tq
    n_steps = nq * (nq + 1) // 2
    bf16 = jnp.bfloat16
    f32b, b16b = 4, 2

    # ---- host-side weight prep (folded into the kernels' operand layouts) ----
    sm_scale = 1.0 / math.sqrt(hd)
    wqkv = jnp.concatenate([params["wq"] * sm_scale, params["wk"], params["wv"]],
                           axis=1).astype(bf16)                      # (C, 3C)
    wp_hm = params["wp"].reshape(H, hd, C).astype(bf16)              # head-major out proj
    w1 = params["w1"].astype(bf16)
    w2 = params["w2"].astype(bf16)

    # Flattened lower-triangular (qi, kv) schedule: no causally-dead grid steps.
    sched = [(i, j) for i in range(nq) for j in range(i + 1)]
    qi_of_step = jnp.asarray([i for i, _ in sched], jnp.int32)
    kv_of_step = jnp.asarray([j for _, j in sched], jnp.int32)

    # ---- VMEM budgets (conservative: assumes double-buffered everything) ----
    ln_bias_bytes = (params["ln1_s"].size + params["ln1_b"].size + params["bp"].size
                     + params["ln2_s"].size + params["ln2_b"].size
                     + params["b1"].size + params["b2"].size) * f32b
    prologue_est = (2 * wqkv.size * b16b
                    + 2 * 2 * tq * C * f32b
                    + 2 * 2 * tq * 3 * C * b16b
                    + tq * 3 * C * (f32b + b16b)
                    + (2 << 20))
    flash_est = (2 * (wp_hm.size + w1.size + w2.size) * b16b + 2 * ln_bias_bytes
                 + 2 * (2 * tq * C * f32b
                        + (H * tq * hd + H * hd * tkv + H * tkv * hd) * b16b)
                 + H * tq * (256 + max(hd, 128)) * f32b              # m, l, acc (lane-padded)
                 + 2 * H * tq * tkv * f32b                           # s / p temporaries
                 + tq * 4 * C * (f32b + b16b)                        # FF hidden activations
                 + (2 << 20))

    def run(const_mode):
        def const_spec(arr, index_map):
            if const_mode is None:
                return pl.BlockSpec(arr.shape, index_map)
            return pl.BlockSpec(arr.shape, index_map, pipeline_mode=const_mode)

        def const_prologue(arr):
            zeros = (0,) * arr.ndim
            return const_spec(arr, lambda b, i: zeros)

        def const_flash(arr):
            zeros = (0,) * arr.ndim
            return const_spec(arr, lambda b, s, qs, ks: zeros)

        # ---------------- kernel 1: LN1 + fused QKV projection ----------------
        qkv = pl.pallas_call(
            _qkv_prologue_kernel,
            out_shape=jax.ShapeDtypeStruct((B, T, 3 * C), bf16),
            grid_spec=pltpu.PrefetchScalarGridSpec(
                num_scalar_prefetch=0,
                grid=(B, nq),
                in_specs=[
                    pl.BlockSpec((1, tq, C), lambda b, i: (b, i, 0)),
                    const_prologue(params["ln1_s"]),
                    const_prologue(params["ln1_b"]),
                    const_prologue(wqkv),
                ],
                out_specs=pl.BlockSpec((1, tq, 3 * C), lambda b, i: (b, i, 0)),
            ),
            compiler_params=pltpu.CompilerParams(
                dimension_semantics=("parallel", "parallel"),
                vmem_limit_bytes=_vmem_limit_bytes(prologue_est),
            ),
        )(x, params["ln1_s"], params["ln1_b"], wqkv)

        # Cheap XLA rearrangement into the layouts the flash kernel DMAs directly:
        #   Q, V head-major (B, H, T, hd); K pre-transposed (B, H, hd, T).
        # TODO(synk): fold this into the prologue's output BlockSpecs (in-kernel einshape)
        # to save one bf16 pass over Q/K/V in HBM.
        q, k, v = jnp.split(qkv, 3, axis=-1)
        q_hm = q.reshape(B, T, H, hd).transpose(0, 2, 1, 3)
        k_t = k.reshape(B, T, H, hd).transpose(0, 2, 3, 1)
        v_hm = v.reshape(B, T, H, hd).transpose(0, 2, 1, 3)

        # ---------------- kernel 2: triangular flash attention + epilogue ----------------
        in_specs = [
            pl.BlockSpec((1, tq, C), lambda b, s, qs, ks: (b, qs[s], 0)),          # x resid
            pl.BlockSpec((1, H, tq, hd), lambda b, s, qs, ks: (b, 0, qs[s], 0)),   # Q
            pl.BlockSpec((1, H, hd, tkv), lambda b, s, qs, ks: (b, 0, 0, ks[s])),  # K^T
            pl.BlockSpec((1, H, tkv, hd), lambda b, s, qs, ks: (b, 0, ks[s], 0)),  # V
            const_flash(wp_hm),
            const_flash(params["bp"]),
            const_flash(params["ln2_s"]),
            const_flash(params["ln2_b"]),
            const_flash(w1),
            const_flash(params["b1"]),
            const_flash(w2),
            const_flash(params["b2"]),
        ]

        return pl.pallas_call(
            functools.partial(_flash_block_kernel, num_heads=H, tq=tq, tkv=tkv),
            out_shape=jax.ShapeDtypeStruct((B, T, C), jnp.float32),
            grid_spec=pltpu.PrefetchScalarGridSpec(
                num_scalar_prefetch=2,
                grid=(B, n_steps),
                in_specs=in_specs,
                out_specs=pl.BlockSpec((1, tq, C), lambda b, s, qs, ks: (b, qs[s], 0)),
                scratch_shapes=[
                    pltpu.VMEM((H, tq, 1), jnp.float32),    # running max
                    pltpu.VMEM((H, tq, 1), jnp.float32),    # running denominator
                    pltpu.VMEM((H, tq, hd), jnp.float32),   # output accumulator
                ],
            ),
            compiler_params=pltpu.CompilerParams(
                dimension_semantics=("parallel", "arbitrary"),
                vmem_limit_bytes=_vmem_limit_bytes(flash_est),
            ),
        )(qi_of_step, kv_of_step,
          x, q_hm, k_t, v_hm,
          wp_hm, params["bp"], params["ln2_s"], params["ln2_b"],
          w1, params["b1"], w2, params["b2"])

    # Constant-index weights only need one VMEM buffer; pl.Buffered(1) halves their
    # footprint.  Fall back to default double buffering if this pipeline_mode is not
    # supported by the installed Pallas/Mosaic version.
    try:
        return run(pl.Buffered(1))
    except Exception:
        return run(None)


def transformer_block_ref(x, params, num_heads):
    """Pure-JAX f32 reference (mirrors the PyTorch forward exactly)."""
    B, T, C = x.shape
    hd = C // num_heads

    def ln(v, s, b):
        mean = v.mean(-1, keepdims=True)
        std = jnp.sqrt(((v - mean) ** 2).mean(-1, keepdims=True))
        return (v - mean) / (std + _LN_EPS) * s[0] + b[0]

    h = ln(x, params["ln1_s"], params["ln1_b"])
    q = (h @ params["wq"]).reshape(B, T, num_heads, hd).transpose(0, 2, 1, 3)
    k = (h @ params["wk"]).reshape(B, T, num_heads, hd).transpose(0, 2, 1, 3)
    v = (h @ params["wv"]).reshape(B, T, num_heads, hd).transpose(0, 2, 1, 3)
    s = jnp.einsum("bhtd,bhsd->bhts", q, k) / math.sqrt(hd)
    mask = jnp.tril(jnp.ones((T, T), dtype=bool))
    s = jnp.where(mask[None, None], s, -jnp.inf)
    p = jax.nn.softmax(s, axis=-1)
    attn = jnp.einsum("bhts,bhsd->bhtd", p, v).transpose(0, 2, 1, 3).reshape(B, T, C)
    x = x + attn @ params["wp"] + params["bp"][0]
    h2 = ln(x, params["ln2_s"], params["ln2_b"])
    ff = h2 @ params["w1"] + params["b1"][0]
    ff = _gelu_exact(ff)
    ff = ff @ params["w2"] + params["b2"][0]
    return x + ff


def init_params(key, d_in, d_out):
    ks = jax.random.split(key, 8)
    scale = 0.02
    f32 = jnp.float32
    return {
        "ln1_s": jnp.ones((1, d_in), f32),
        "ln1_b": jnp.zeros((1, d_in), f32),
        "wq": scale * jax.random.normal(ks[0], (d_in, d_out), f32),
        "wk": scale * jax.random.normal(ks[1], (d_in, d_out), f32),
        "wv": scale * jax.random.normal(ks[2], (d_in, d_out), f32),
        "wp": scale * jax.random.normal(ks[3], (d_out, d_out), f32),
        "bp": jnp.zeros((1, d_out), f32),
        "ln2_s": jnp.ones((1, d_in), f32),
        "ln2_b": jnp.zeros((1, d_in), f32),
        "w1": scale * jax.random.normal(ks[4], (d_in, 4 * d_in), f32),
        "b1": 0.01 * jnp.ones((1, 4 * d_in), f32),
        "w2": scale * jax.random.normal(ks[5], (4 * d_in, d_in), f32),
        "b2": 0.01 * jnp.ones((1, d_in), f32),
    }


if __name__ == "__main__":
    # batch=2, context_length=256, d_in=d_out=128, 4 heads, query/kv tile = 128.
    # Small, but exercises the prologue, the triangular schedule (3 live steps of 4)
    # and the head-major flash + fused-epilogue path.
    B, T, C, H = 2, 256, 128, 4
    key = jax.random.PRNGKey(0)
    kx, kp = jax.random.split(key)
    x = jax.random.normal(kx, (B, T, C), jnp.float32)
    params = init_params(kp, C, C)

    out = jax.block_until_ready(transformer_block(x, params, num_heads=H, tq=128))

    ref = transformer_block_ref(x, params, num_heads=H)
    assert out.shape == (B, T, C)
    # bf16 MXU operands (f32 accumulation) vs the all-f32 reference -> loosened tolerance.
    max_err = float(jnp.max(jnp.abs(out - ref)))
    assert jnp.allclose(out, ref, rtol=1e-2, atol=1e-2), f"mismatch, max abs err {max_err}"

    print("KERNEL_OK")
</pallas_src>

<mosaic_0001>
module attributes {stable_mosaic.version = 11 : i64} {
  func.func @_qkv_prologue_kernel(%arg0: i32, %arg1: i32, %arg2: memref<1x128x128xf32, #tpu.memory_space<vmem>>, %arg3: memref<1x128xf32, #tpu.memory_space<vmem>>, %arg4: memref<1x128xf32, #tpu.memory_space<vmem>>, %arg5: memref<128x384xbf16, #tpu.memory_space<vmem>>, %arg6: memref<1x128x384xbf16, #tpu.memory_space<vmem>>) attributes {dimension_semantics = [#tpu.dimension_semantics<parallel>, #tpu.dimension_semantics<parallel>], iteration_bounds = array<i64: 2, 2>, scalar_prefetch = 0 : i64, scratch_operands = 0 : i64, tpu.core_type = #tpu.core_type<tc>, window_params = [{transform_indices = @transform_0, window_bounds = array<i64: 1, 128, 128>}, {pipeline_mode = #tpu.pipeline_mode<synchronous>, transform_indices = @transform_1, window_bounds = array<i64: 1, 128>}, {pipeline_mode = #tpu.pipeline_mode<synchronous>, transform_indices = @transform_2, window_bounds = array<i64: 1, 128>}, {pipeline_mode = #tpu.pipeline_mode<synchronous>, transform_indices = @transform_3, window_bounds = array<i64: 128, 384>}, {transform_indices = @transform_4, window_bounds = array<i64: 1, 128, 384>}]} {
    %c0 = arith.constant 0 : index
    %c0_0 = arith.constant 0 : index
    %c0_1 = arith.constant 0 : index
    %0 = vector.load %arg2[%c0, %c0_0, %c0_1] : memref<1x128x128xf32, #tpu.memory_space<vmem>>, vector<1x128x128xf32>
    %1 = vector.shape_cast %0 : vector<1x128x128xf32> to vector<128x128xf32>
    %c0_2 = arith.constant 0 : index
    %c0_3 = arith.constant 0 : index
    %2 = vector.load %arg3[%c0_2, %c0_3] : memref<1x128xf32, #tpu.memory_space<vmem>>, vector<1x128xf32>
    %3 = vector.shape_cast %2 : vector<1x128xf32> to vector<128xf32>
    %c0_4 = arith.constant 0 : index
    %c0_5 = arith.constant 0 : index
    %4 = vector.load %arg4[%c0_4, %c0_5] : memref<1x128xf32, #tpu.memory_space<vmem>>, vector<1x128xf32>
    %5 = vector.shape_cast %4 : vector<1x128xf32> to vector<128xf32>
    %cst = arith.constant dense<0.000000e+00> : vector<128xf32>
    %6 = vector.multi_reduction <add>, %1, %cst [1] : vector<128x128xf32> to vector<128xf32>
    %7 = vector.shape_cast %6 : vector<128xf32> to vector<128x1xf32>
    %cst_6 = arith.constant 1.280000e+02 : f32
    %8 = vector.broadcast %cst_6 : f32 to vector<128x1xf32>
    %9 = arith.divf %7, %8 : vector<128x1xf32>
    %10 = vector.broadcast %9 : vector<128x1xf32> to vector<128x128xf32>
    %11 = arith.subf %1, %10 : vector<128x128xf32>
    %12 = arith.mulf %11, %11 : vector<128x128xf32>
    %cst_7 = arith.constant dense<0.000000e+00> : vector<128xf32>
    %13 = vector.multi_reduction <add>, %12, %cst_7 [1] : vector<128x128xf32> to vector<128xf32>
    %14 = vector.shape_cast %13 : vector<128xf32> to vector<128x1xf32>
    %cst_8 = arith.constant 1.280000e+02 : f32
    %15 = vector.broadcast %cst_8 : f32 to vector<128x1xf32>
    %16 = arith.divf %14, %15 : vector<128x1xf32>
    %17 = vector.broadcast %9 : vector<128x1xf32> to vector<128x128xf32>
    %18 = arith.subf %1, %17 : vector<128x128xf32>
    %19 = math.sqrt %16 : vector<128x1xf32>
    %cst_9 = arith.constant 9.99999974E-6 : f32
    %20 = vector.broadcast %cst_9 : f32 to vector<128x1xf32>
    %21 = arith.addf %19, %20 : vector<128x1xf32>
    %22 = vector.broadcast %21 : vector<128x1xf32> to vector<128x128xf32>
    %23 = arith.divf %18, %22 : vector<128x128xf32>
    %24 = vector.shape_cast %3 : vector<128xf32> to vector<1x128xf32>
    %25 = vector.broadcast %24 : vector<1x128xf32> to vector<128x128xf32>
    %26 = arith.mulf %23, %25 : vector<128x128xf32>
    %27 = vector.shape_cast %5 : vector<128xf32> to vector<1x128xf32>
    %28 = vector.broadcast %27 : vector<1x128xf32> to vector<128x128xf32>
    %29 = arith.addf %26, %28 : vector<128x128xf32>
    %30 = arith.truncf %29 : vector<128x128xf32> to vector<128x128xbf16>
    %c0_10 = arith.constant 0 : index
    %c0_11 = arith.constant 0 : index
    %31 = vector.load %arg5[%c0_10, %c0_11] : memref<128x384xbf16, #tpu.memory_space<vmem>>, vector<128x384xbf16>
    %cst_12 = arith.constant dense<0.000000e+00> : vector<128x384xf32>
    %32 = tpu.matmul %30, %31, %cst_12 {dimension_numbers = #tpu.dot_dimension_numbers<[1], [0], [0], [1], [0, 0, 1, 1], [], []>} : vector<128x128xbf16>, vector<128x384xbf16>, vector<128x384xf32> -> vector<128x384xf32>
    %33 = arith.truncf %32 : vector<128x384xf32> to vector<128x384xbf16>
    %c0_13 = arith.constant 0 : index
    %c0_14 = arith.constant 0 : index
    %c0_15 = arith.constant 0 : index
    %34 = vector.load %arg6[%c0_13, %c0_14, %c0_15] : memref<1x128x384xbf16, #tpu.memory_space<vmem>>, vector<1x128x384xbf16>
    %35 = vector.shape_cast %34 : vector<1x128x384xbf16> to vector<128x384xbf16>
    %36 = vector.shape_cast %33 : vector<128x384xbf16> to vector<1x128x384xbf16>
    tpu.vector_store %arg6[%c0_13, %c0_14, %c0_15], %36 {strides = array<i32>} : memref<1x128x384xbf16, #tpu.memory_space<vmem>>, vector<1x128x384xbf16>,
    return
  }
  func.func @transform_0(%arg0: i32, %arg1: i32) -> (i32, i32, i32) {
    %c0_i32 = arith.constant 0 : i32
    %c0_i32_0 = arith.constant 0 : i32
    return %arg0, %arg1, %c0_i32 : i32, i32, i32
  }
  func.func @transform_1(%arg0: i32, %arg1: i32) -> (i32, i32) {
    %c0_i32 = arith.constant 0 : i32
    %c0_i32_0 = arith.constant 0 : i32
    %c0_i32_1 = arith.constant 0 : i32
    return %c0_i32, %c0_i32_0 : i32, i32
  }
  func.func @transform_2(%arg0: i32, %arg1: i32) -> (i32, i32) {
    %c0_i32 = arith.constant 0 : i32
    %c0_i32_0 = arith.constant 0 : i32
    %c0_i32_1 = arith.constant 0 : i32
    return %c0_i32, %c0_i32_0 : i32, i32
  }
  func.func @transform_3(%arg0: i32, %arg1: i32) -> (i32, i32) {
    %c0_i32 = arith.constant 0 : i32
    %c0_i32_0 = arith.constant 0 : i32
    %c0_i32_1 = arith.constant 0 : i32
    return %c0_i32, %c0_i32_0 : i32, i32
  }
  func.func @transform_4(%arg0: i32, %arg1: i32) -> (i32, i32, i32) {
    %c0_i32 = arith.constant 0 : i32
    %c0_i32_0 = arith.constant 0 : i32
    return %arg0, %arg1, %c0_i32 : i32, i32, i32
  }
}

module attributes {stable_mosaic.version = 11 : i64} {
  func.func @_qkv_prologue_kernel(%arg0: i32, %arg1: i32, %arg2: memref<1x128x128xf32, #tpu.memory_space<vmem>>, %arg3: memref<1x128xf32, #tpu.memory_space<vmem>>, %arg4: memref<1x128xf32, #tpu.memory_space<vmem>>, %arg5: memref<128x384xbf16, #tpu.memory_space<vmem>>, %arg6: memref<1x128x384xbf16, #tpu.memory_space<vmem>>) attributes {dimension_semantics = [#tpu.dimension_semantics<parallel>, #tpu.dimension_semantics<parallel>], iteration_bounds = array<i64: 2, 2>, scalar_prefetch = 0 : i64, scratch_operands = 0 : i64, tpu.core_type = #tpu.core_type<tc>, window_params = [{transform_indices = @transform_0, window_bounds = array<i64: 1, 128, 128>}, {pipeline_mode = #tpu.pipeline_mode<synchronous>, transform_indices = @transform_1, window_bounds = array<i64: 1, 128>}, {pipeline_mode = #tpu.pipeline_mode<synchronous>, transform_indices = @transform_2, window_bounds = array<i64: 1, 128>}, {pipeline_mode = #tpu.pipeline_mode<synchronous>, transform_indices = @transform_3, window_bounds = array<i64: 128, 384>}, {transform_indices = @transform_4, window_bounds = array<i64: 1, 128, 384>}]} {
    %c0 = arith.constant 0 : index
    %c0_0 = arith.constant 0 : index
    %c0_1 = arith.constant 0 : index
    %0 = vector.load %arg2[%c0, %c0_0, %c0_1] : memref<1x128x128xf32, #tpu.memory_space<vmem>>, vector<1x128x128xf32>
    %1 = vector.shape_cast %0 : vector<1x128x128xf32> to vector<128x128xf32>
    %c0_2 = arith.constant 0 : index
    %c0_3 = arith.constant 0 : index
    %2 = vector.load %arg3[%c0_2, %c0_3] : memref<1x128xf32, #tpu.memory_space<vmem>>, vector<1x128xf32>
    %3 = vector.shape_cast %2 : vector<1x128xf32> to vector<128xf32>
    %c0_4 = arith.constant 0 : index
    %c0_5 = arith.constant 0 : index
    %4 = vector.load %arg4[%c0_4, %c0_5] : memref<1x128xf32, #tpu.memory_space<vmem>>, vector<1x128xf32>
    %5 = vector.shape_cast %4 : vector<1x128xf32> to vector<128xf32>
    %cst = arith.constant dense<0.000000e+00> : vector<128xf32>
    %6 = vector.multi_reduction <add>, %1, %cst [1] : vector<128x128xf32> to vector<128xf32>
    %7 = vector.shape_cast %6 : vector<128xf32> to vector<128x1xf32>
    %cst_6 = arith.constant 1.280000e+02 : f32
    %8 = vector.broadcast %cst_6 : f32 to vector<128x1xf32>
    %9 = arith.divf %7, %8 : vector<128x1xf32>
    %10 = vector.broadcast %9 : vector<128x1xf32> to vector<128x128xf32>
    %11 = arith.subf %1, %10 : vector<128x128xf32>
    %12 = arith.mulf %11, %11 : vector<128x128xf32>
    %cst_7 = arith.constant dense<0.000000e+00> : vector<128xf32>
    %13 = vector.multi_reduction <add>, %12, %cst_7 [1] : vector<128x128xf32> to vector<128xf32>
    %14 = vector.shape_cast %13 : vector<128xf32> to vector<128x1xf32>
    %cst_8 = arith.constant 1.280000e+02 : f32
    %15 = vector.broadcast %cst_8 : f32 to vector<128x1xf32>
    %16 = arith.divf %14, %15 : vector<128x1xf32>
    %17 = vector.broadcast %9 : vector<128x1xf32> to vector<128x128xf32>
    %18 = arith.subf %1, %17 : vector<128x128xf32>
    %19 = math.sqrt %16 : vector<128x1xf32>
    %cst_9 = arith.constant 9.99999974E-6 : f32
    %20 = vector.broadcast %cst_9 : f32 to vector<128x1xf32>
    %21 = arith.addf %19, %20 : vector<128x1xf32>
    %22 = vector.broadcast %21 : vector<128x1xf32> to vector<128x128xf32>
    %23 = arith.divf %18, %22 : vector<128x128xf32>
    %24 = vector.shape_cast %3 : vector<128xf32> to vector<1x128xf32>
    %25 = vector.broadcast %24 : vector<1x128xf32> to vector<128x128xf32>
    %26 = arith.mulf %23, %25 : vector<128x128xf32>
    %27 = vector.shape_cast %5 : vector<128xf32> to vector<1x128xf32>
    %28 = vector.broadcast %27 : vector<1x128xf32> to vector<128x128xf32>
    %29 = arith.addf %26, %28 : vector<128x128xf32>
    %30 = arith.truncf %29 : vector<128x128xf32> to vector<128x128xbf16>
    %c0_10 = arith.constant 0 : index
    %c0_11 = arith.constant 0 : index
    %31 = vector.load %arg5[%c0_10, %c0_11] : memref<128x384xbf16, #tpu.memory_space<vmem>>, vector<128x384xbf16>
    %cst_12 = arith.constant dense<0.000000e+00> : vector<128x384xf32>
    %32 = tpu.matmul %30, %31, %cst_12 {dimension_numbers = #tpu.dot_dimension_numbers<[1], [0], [0], [1], [0, 0, 1, 1], [], []>} : vector<128x128xbf16>, vector<128x384xbf16>, vector<128x384xf32> -> vector<128x384xf32>
    %33 = arith.truncf %32 : vector<128x384xf32> to vector<128x384xbf16>
    %c0_13 = arith.constant 0 : index
    %c0_14 = arith.constant 0 : index
    %c0_15 = arith.constant 0 : index
    %34 = vector.load %arg6[%c0_13, %c0_14, %c0_15] : memref<1x128x384xbf16, #tpu.memory_space<vmem>>, vector<1x128x384xbf16>
    %35 = vector.shape_cast %34 : vector<1x128x384xbf16> to vector<128x384xbf16>
    %36 = vector.shape_cast %33 : vector<128x384xbf16> to vector<1x128x384xbf16>
    tpu.vector_store %arg6[%c0_13, %c0_14, %c0_15], %36 {strides = array<i32>} : memref<1x128x384xbf16, #tpu.memory_space<vmem>>, vector<1x128x384xbf16>,
    return
  }
  func.func @transform_0(%arg0: i32, %arg1: i32) -> (i32, i32, i32) {
    %c0_i32 = arith.constant 0 : i32
    %c0_i32_0 = arith.constant 0 : i32
    return %arg0, %arg1, %c0_i32 : i32, i32, i32
  }
  func.func @transform_1(%arg0: i32, %arg1: i32) -> (i32, i32) {
    %c0_i32 = arith.constant 0 : i32
    %c0_i32_0 = arith.constant 0 : i32
    %c0_i32_1 = arith.constant 0 : i32
    return %c0_i32, %c0_i32_0 : i32, i32
  }
  func.func @transform_2(%arg0: i32, %arg1: i32) -> (i32, i32) {
    %c0_i32 = arith.constant 0 : i32
    %c0_i32_0 = arith.constant 0 : i32
    %c0_i32_1 = arith.constant 0 : i32
    return %c0_i32, %c0_i32_0 : i32, i32
  }
  func.func @transform_3(%arg0: i32, %arg1: i32) -> (i32, i32) {
    %c0_i32 = arith.constant 0 : i32
    %c0_i32_0 = arith.constant 0 : i32
    %c0_i32_1 = arith.constant 0 : i32
    return %c0_i32, %c0_i32_0 : i32, i32
  }
  func.func @transform_4(%arg0: i32, %arg1: i32) -> (i32, i32, i32) {
    %c0_i32 = arith.constant 0 : i32
    %c0_i32_0 = arith.constant 0 : i32
    return %arg0, %arg1, %c0_i32 : i32, i32, i32
  }
}

</mosaic_0001>

<llo_original>
// kernel: tpu_custom_call.1
$region0: #{tpu_custom_call.1}
  #allocation0 [shape = 'u32[]', space=smem, size = 0x4, offset = 0x4, fixed_abs, tag = 'smem constant byte address 0x4 - core index']
  #allocation1 [shape = 'u32[144,128]{1,0:T(1,128)}', space=vmem, size = 0x12000, scoped, tag = 'internal scratch']
  %s0 = inlined_call_operand.hbm [shape: f32[2,256,128], index: 0, kind: input, shape index: {}]
  %s1 = inlined_call_operand.vmem [shape: f32[1,128], index: 1, kind: input, shape index: {}]
  %s2 = inlined_call_operand.vmem [shape: f32[1,128], index: 2, kind: input, shape index: {}]
  %s3 = inlined_call_operand.hbm [shape: bf16[128,384], index: 3, kind: input, shape index: {}]
  %s4 = inlined_call_operand.hbm [shape: bf16[2,256,384], index: 4, kind: output, shape index: {}]
  %s5 = sld [smem:[#allocation0]]
  $region57: #{tpu_custom_call.1} parent=0
    _
  %s7 = ssub.s32 1, %s5
  %s8 = scalar_select 0, %s7, %s5
  $region1: #{tpu_custom_call.1} parent=0
    #allocation2 [shape = 'u8[131072]{0}', space=vmem, size = 0x20000, scoped, tag = 'input window, operand 0']
    #allocation3 [shape = 's32[2]{0}', space=sflag, size = 0x8, scoped, tag = 'scoped memory for tpu_custom_call.1']
    #allocation4 [shape = 's32[2]{0}', space=sflag, size = 0x8, scoped, tag = 'scoped memory for tpu_custom_call.1']
    #allocation5 [shape = 'u8[98304]{0}', space=vmem, size = 0x18000, scoped, tag = 'input window, operand 3, single buffered']
    #allocation6 [shape = 's32[1]{0}', space=sflag, size = 0x4, scoped, tag = 'scoped memory for tpu_custom_call.1']
    #allocation7 [shape = 'u8[196608]{0}', space=vmem, size = 0x30000, scoped, tag = 'output window, operand 0']
    %9 = vsyncpa [#allocation3], 0
    %s10 = scalar_lea.sflag [#allocation3], 1
    %11 = vsyncpa %s10, 0
    %12 = vsyncpa [#allocation6], 0
    %13 = vsyncpa [#allocation4], 0
    %s14 = scalar_lea.sflag [#allocation4], 1
    %15 = vsyncpa %s14, 0
    loop: start=0, step=1, limit=6
    $region2: #{tpu_custom_call.1} parent=1 // loop_pre_header
      _
    $region3: #{tpu_custom_call.1} parent=1 // loop_header
      %s17 = sphi 0, %s21
      %p18 = scmp.ge.s32.totalorder %s17, 6
      %s24 = sphi 0, %s36
      %s25 = sphi 0, %s32
      %s26 = sphi 0, %s24
      %s27 = sphi 0, %s25
      %s28 = sphi 0, %s26
      %s29 = sphi 0, %s27
      %s41 = sphi 0, %s43
      %s44 = sphi 0, %s41
      %s45 = sphi 0, %s44
      %s61 = sphi 0, %s45
      %s65 = sphi 0, %s65
      %s67 = sphi 0, %s65
      %s68 = sphi 0, %s67
      %s82 = sphi 0, %s68
      %s86 = sphi 0, %s86
      %s88 = sphi 0, %s86
      %s89 = sphi 0, %s88
      %s103 = sphi 0, %s89
      %s107 = sphi 0, %s107
      %s109 = sphi 0, %s107
      %s110 = sphi 0, %s109
      %s124 = sphi 0, %s110
      %s132 = sphi 0, %s134
      %s135 = sphi 0, %s132
      %s136 = sphi 0, %s135
      %s152 = sphi 0, %s136
    $region4: #{tpu_custom_call.1} parent=1 // loop_header_branch
      %20 = sbr.rel (%p18) target = $region8
    $region5: #{tpu_custom_call.1} parent=1 // loop_body
      %s22 = ssub.s32 %s17, 1
      %s23 = ssub.s32 %s17, 2
      %s30 = sadd.s32 1, %s25
      %p31 = scmp.ge.s32.totalorder %s30, 2
      %s32 = scalar_select %p31, 0, %s30
      %s33 = sadd.s32 1, %s24
      %s34 = scalar_select %p31, %s33, %s24
      %p35 = scmp.ge.s32.totalorder %s34, 2
      %s36 = scalar_select %p35, 0, %s34
      %s37 = ssub.s32 %s24, %s36
      %s38 = ssub.s32 %s25, %s32
      %s39 = sor.u32 %s37, %s38
      %p40 = scmp.eq.s32.totalorder %s39, 0
      %s42 = sadd.s32 %s41, 1
      %s43 = scalar_select %p40, %s41, %s42
      %p46 = pneg %p40
      %p47 = scmp.eq.s32.totalorder %s17, 3
      %p48 = por %p46, %p47
      %p49 = scmp.ne.s32.totalorder %s41, %s44
      %p50 = scmp.eq.s32.totalorder %s17, 0
      %p51 = por %p49, %p50
      %p52 = scmp.ne.s32.totalorder %s41, %s44
      %p53 = scmp.eq.s32.totalorder %s22, 3
      %p54 = por %p52, %p53
      %p55 = scmp.ne.s32.totalorder %s44, %s45
      %p56 = scmp.eq.s32.totalorder %s22, 0
      %p57 = por %p55, %p56
      %p58 = scmp.ne.s32.totalorder %s44, %s45
      %p59 = scmp.eq.s32.totalorder %s23, 3
      %p60 = por %p58, %p59
      %p62 = scmp.ne.s32.totalorder %s45, %s61
      %p63 = scmp.eq.s32.totalorder %s23, 0
      %p64 = por %p62, %p63
      %s66 = sadd.s32 %s65, 1
      %p69 = scmp.eq.s32.totalorder %s17, 3
      %p70 = scmp.ne.s32.totalorder %s65, %s67
      %p71 = scmp.eq.s32.totalorder %s17, 0
      %p72 = por %p70, %p71
      %p73 = scmp.ne.s32.totalorder %s65, %s67
      %p74 = scmp.eq.s32.totalorder %s22, 3
      %p75 = por %p73, %p74
      %p76 = scmp.ne.s32.totalorder %s67, %s68
      %p77 = scmp.eq.s32.totalorder %s22, 0
      %p78 = por %p76, %p77
      %p79 = scmp.ne.s32.totalorder %s67, %s68
      %p80 = scmp.eq.s32.totalorder %s23, 3
      %p81 = por %p79, %p80
      %p83 = scmp.ne.s32.totalorder %s68, %s82
      %p84 = scmp.eq.s32.totalorder %s23, 0
      %p85 = por %p83, %p84
      %s87 = sadd.s32 %s86, 1
      %p90 = scmp.eq.s32.totalorder %s17, 3
      %p91 = scmp.ne.s32.totalorder %s86, %s88
      %p92 = scmp.eq.s32.totalorder %s17, 0
      %p93 = por %p91, %p92
      %p94 = scmp.ne.s32.totalorder %s86, %s88
      %p95 = scmp.eq.s32.totalorder %s22, 3
      %p96 = por %p94, %p95
      %p97 = scmp.ne.s32.totalorder %s88, %s89
      %p98 = scmp.eq.s32.totalorder %s22, 0
      %p99 = por %p97, %p98
      %p100 = scmp.ne.s32.totalorder %s88, %s89
      %p101 = scmp.eq.s32.totalorder %s23, 3
      %p102 = por %p100, %p101
      %p104 = scmp.ne.s32.totalorder %s89, %s103
      %p105 = scmp.eq.s32.totalorder %s23, 0
      %p106 = por %p104, %p105
      %s108 = sadd.s32 %s107, 1
      %p111 = scmp.eq.s32.totalorder %s17, 3
      %p112 = scmp.ne.s32.totalorder %s107, %s109
      %p113 = scmp.eq.s32.totalorder %s17, 0
      %p114 = por %p112, %p113
      %p115 = scmp.ne.s32.totalorder %s107, %s109
      %p116 = scmp.eq.s32.totalorder %s22, 3
      %p117 = por %p115, %p116
      %p118 = scmp.ne.s32.totalorder %s109, %s110
      %p119 = scmp.eq.s32.totalorder %s22, 0
      %p120 = por %p118, %p119
      %p121 = scmp.ne.s32.totalorder %s109, %s110
      %p122 = scmp.eq.s32.totalorder %s23, 3
      %p123 = por %p121, %p122
      %p125 = scmp.ne.s32.totalorder %s110, %s124
      %p126 = scmp.eq.s32.totalorder %s23, 0
      %p127 = por %p125, %p126
      %s128 = ssub.s32 %s24, %s36
      %s129 = ssub.s32 %s25, %s32
      %s130 = sor.u32 %s128, %s129
      %p131 = scmp.eq.s32.totalorder %s130, 0
      %s133 = sadd.s32 %s132, 1
      %s134 = scalar_select %p131, %s132, %s133
      %p137 = pneg %p131
      %p138 = scmp.eq.s32.totalorder %s17, 3
      %p139 = por %p137, %p138
      %p140 = scmp.ne.s32.totalorder %s132, %s135
      %p141 = scmp.eq.s32.totalorder %s17, 0
      %p142 = por %p140, %p141
      %p143 = scmp.ne.s32.totalorder %s132, %s135
      %p144 = scmp.eq.s32.totalorder %s22, 3
      %p145 = por %p143, %p144
      %p146 = scmp.ne.s32.totalorder %s135, %s136
      %p147 = scmp.eq.s32.totalorder %s22, 0
      %p148 = por %p146, %p147
      %p149 = scmp.ne.s32.totalorder %s135, %s136
      %p150 = scmp.eq.s32.totalorder %s23, 3
      %p151 = por %p149, %p150
      %p153 = scmp.ne.s32.totalorder %s136, %s152
      %p154 = scmp.eq.s32.totalorder %s23, 0
      %p155 = por %p153, %p154
      %p156 = scmp.le.s32.totalorder 1, %s17
      %p157 = scmp.lt.s32.totalorder %s17, 5
      %p158 = pnand %p156, %p157
      %p159 = pneg %p158
      // Predicated region
      $region9: #{tpu_custom_call.1} parent=5 // pred_check
        _
      $region10: #{tpu_custom_call.1} parent=5 // pred_check_branch
        %161 = sbr.rel (%p158) target = $region12
      $region11: #{tpu_custom_call.1} parent=5 // pred_region
        %s162 = ssub.s32 %s17, 1
        // Predicated region
        $region13: #{tpu_custom_call.1} parent=11 // pred_check
          %p163 = pneg %p78
        $region14: #{tpu_custom_call.1} parent=11 // pred_check_branch
          %165 = sbr.rel (%p163) target = $region16
        $region15: #{tpu_custom_call.1} parent=11 // pred_region
          _
        $region16: #{tpu_custom_call.1} parent=11 // pred_fallthru
          _
        // Predicated region
        $region17: #{tpu_custom_call.1} parent=11 // pred_check
          %p166 = pneg %p99
        $region18: #{tpu_custom_call.1} parent=11 // pred_check_branch
          %168 = sbr.rel (%p166) target = $region20
        $region19: #{tpu_custom_call.1} parent=11 // pred_region
          _
        $region20: #{tpu_custom_call.1} parent=11 // pred_fallthru
          _
        // Predicated region
        $region21: #{tpu_custom_call.1} parent=11 // pred_check
          %p169 = pneg %p120
        $region22: #{tpu_custom_call.1} parent=11 // pred_check_branch
          %171 = sbr.rel (%p169) target = $region24
        $region23: #{tpu_custom_call.1} parent=11 // pred_region
          %s173 = ssub.s32 3072, 3072
          %174 = vsyncadd [#allocation6], %s173
          %s175 = sshll.u32 [#allocation5], 4
          %s176 = int_to_ptr.vmem [resolvable:$true] %s175
          %181 = dma.hbm_to_vmem [thread:$0]  %s3, 3072, %s176, [#allocation6], 192, 192, 12
        $region24: #{tpu_custom_call.1} parent=11 // pred_fallthru
          _
      $region12: #{tpu_custom_call.1} parent=5 // pred_fallthru
        _
      %p182 = scmp.lt.s32.totalorder %s17, 4
      // Predicated region
      $region25: #{tpu_custom_call.1} parent=5 // pred_check
        %p183 = pneg %p182
      $region26: #{tpu_custom_call.1} parent=5 // pred_check_branch
        %185 = sbr.rel (%p183) target = $region28
      $region27: #{tpu_custom_call.1} parent=5 // pred_region
        // Predicated region
        $region29: #{tpu_custom_call.1} parent=27 // pred_check
          %p186 = pneg %p51
        $region30: #{tpu_custom_call.1} parent=27 // pred_check_branch
          %188 = sbr.rel (%p186) target = $region32
        $region31: #{tpu_custom_call.1} parent=27 // pred_region
          %s189 = sand.u32 %s41, 1
          %s190 = scalar_lea.sflag [#allocation3], %s189
          %s191 = sand.u32 %s41, 1
          %s192 = smul.addr %s191, 128
          %s193 = scalar_lea.vmem [#allocation2], %s192
          %s194 = smul.u32 16, %s25
          %s196 = ssub.s32 2048, 2048
          %197 = vsyncadd %s190, %s196
          %s198 = smul.addr %s24, 32
          %s199 = sadd.s32 %s194, %s198
          %s200 = smul.addr %s199, 128
          %s201 = scalar_lea.hbm %s0, %s200
          %s202 = sshll.u32 %s193, 4
          %s203 = int_to_ptr.vmem [resolvable:$true] %s202
          %208 = dma.hbm_to_vmem [thread:$0]  %s201, 2048, %s203, %s190, 128, 128, 8
        $region32: #{tpu_custom_call.1} parent=27 // pred_fallthru
          _
      $region28: #{tpu_custom_call.1} parent=5 // pred_fallthru
        _
      %p209 = scmp.le.s32.totalorder 1, %s17
      %p210 = scmp.lt.s32.totalorder %s17, 5
      %p211 = pnand %p209, %p210
      %p212 = pneg %p211
      // Predicated region
      $region33: #{tpu_custom_call.1} parent=5 // pred_check
        _
      $region34: #{tpu_custom_call.1} parent=5 // pred_check_branch
        %214 = sbr.rel (%p211) target = $region36
      $region35: #{tpu_custom_call.1} parent=5 // pred_region
        %s215 = ssub.s32 %s17, 1
        %s216 = sand.u32 %s44, 1
        %s217 = scalar_lea.sflag [#allocation3], %s216
        %s218 = sand.u32 %s44, 1
        %s219 = smul.addr %s218, 128
        %s220 = scalar_lea.vmem [#allocation2], %s219
        // Predicated region
        $region37: #{tpu_custom_call.1} parent=35 // pred_check
          %p221 = pneg %p57
        $region38: #{tpu_custom_call.1} parent=35 // pred_check_branch
          %223 = sbr.rel (%p221) target = $region40
        $region39: #{tpu_custom_call.1} parent=35 // pred_region
          %224 = dma.done %s217, 2048
        $region40: #{tpu_custom_call.1} parent=35 // pred_fallthru
          _
        // Predicated region
        $region41: #{tpu_custom_call.1} parent=35 // pred_check
          %p225 = pneg %p120
        $region42: #{tpu_custom_call.1} parent=35 // pred_check_branch
          %227 = sbr.rel (%p225) target = $region44
        $region43: #{tpu_custom_call.1} parent=35 // pred_region
          %228 = dma.done [#allocation6], 3072
        $region44: #{tpu_custom_call.1} parent=35 // pred_fallthru
          _
        %s229 = sand.u32 %s44, 1
        %s230 = scalar_lea.sflag [#allocation3], %s229
        %s231 = sand.u32 %s44, 1
        %s232 = smul.addr %s231, 128
        %s233 = scalar_lea.vmem [#allocation2], %s232
        %p234 = pneg %p57
        %p235 = pneg %p54
        %p236 = pneg %p78
        %p237 = pneg %p75
        %p238 = pneg %p99
        %p239 = pneg %p96
        %p240 = pneg %p120
        %p241 = pneg %p117
        %p242 = pneg %p148
        %p243 = pneg %p145
        %s244 = sand.u32 %s135, 1
        %s245 = scalar_lea.sflag [#allocation4], %s244
        %s246 = sand.u32 %s135, 1
        %s247 = smul.addr %s246, 192
        %s248 = scalar_lea.vmem [#allocation7], %s247
        %s249 = smul.u32 16, %s27
        %s250 = smul.u32 16, %s27
        %v252 = vld [vmem:[%s220] sm:$0xff]
        %v253 = vld [vmem:[%s220 + $0x8] sm:$0xff]
        %v254 = vld [vmem:[%s220 + $0x10] sm:$0xff]
        %v255 = vld [vmem:[%s220 + $0x18] sm:$0xff]
        %v256 = vld [vmem:[%s220 + $0x20] sm:$0xff]
        %v257 = vld [vmem:[%s220 + $0x28] sm:$0xff]
        %v258 = vld [vmem:[%s220 + $0x30] sm:$0xff]
        %v259 = vld [vmem:[%s220 + $0x38] sm:$0xff]
        %v260 = vld [vmem:[%s220 + $0x40] sm:$0xff]
        %v261 = vld [vmem:[%s220 + $0x48] sm:$0xff]
        %v262 = vld [vmem:[%s220 + $0x50] sm:$0xff]
        %v263 = vld [vmem:[%s220 + $0x58] sm:$0xff]
        %v264 = vld [vmem:[%s220 + $0x60] sm:$0xff]
        %v265 = vld [vmem:[%s220 + $0x68] sm:$0xff]
        %v266 = vld [vmem:[%s220 + $0x70] sm:$0xff]
        %v267 = vld [vmem:[%s220 + $0x78] sm:$0xff]
        %v268 = vld [vmem:[%s1] sm:$0x1]
        %v269 = vld [vmem:[%s2] sm:$0x1]
        %270 = vadd.xlane.f32.xlu0 %v252
        %v271 = vpop.xlane.xlu0 %270
        %272 = vadd.xlane.f32.xlu0 %v253
        %v273 = vpop.xlane.xlu0 %272
        %274 = vadd.xlane.f32.xlu0 %v254
        %v275 = vpop.xlane.xlu0 %274
        %276 = vadd.xlane.f32.xlu0 %v255
        %v277 = vpop.xlane.xlu0 %276
        %278 = vadd.xlane.f32.xlu0 %v256
        %v279 = vpop.xlane.xlu0 %278
        %280 = vadd.xlane.f32.xlu0 %v257
        %v281 = vpop.xlane.xlu0 %280
        %282 = vadd.xlane.f32.xlu0 %v258
        %v283 = vpop.xlane.xlu0 %282
        %284 = vadd.xlane.f32.xlu0 %v259
        %v285 = vpop.xlane.xlu0 %284
        %286 = vadd.xlane.f32.xlu0 %v260
        %v287 = vpop.xlane.xlu0 %286
        %288 = vadd.xlane.f32.xlu0 %v261
        %v289 = vpop.xlane.xlu0 %288
        %290 = vadd.xlane.f32.xlu0 %v262
        %v291 = vpop.xlane.xlu0 %290
        %292 = vadd.xlane.f32.xlu0 %v263
        %v293 = vpop.xlane.xlu0 %292
        %294 = vadd.xlane.f32.xlu0 %v264
        %v295 = vpop.xlane.xlu0 %294
        %296 = vadd.xlane.f32.xlu0 %v265
        %v297 = vpop.xlane.xlu0 %296
        %298 = vadd.xlane.f32.xlu0 %v266
        %v299 = vpop.xlane.xlu0 %298
        %300 = vadd.xlane.f32.xlu0 %v267
        %v301 = vpop.xlane.xlu0 %300
        %v302 = vrcp.pop 128.0
        %v303 = vmul.f32 %v271, %v302
        %v304 = vmul.f32 %v273, %v302
        %v305 = vmul.f32 %v275, %v302
        %v306 = vmul.f32 %v277, %v302
        %v307 = vmul.f32 %v279, %v302
        %v308 = vmul.f32 %v281, %v302
        %v309 = vmul.f32 %v283, %v302
        %v310 = vmul.f32 %v285, %v302
        %v311 = vmul.f32 %v287, %v302
        %v312 = vmul.f32 %v289, %v302
        %v313 = vmul.f32 %v291, %v302
        %v314 = vmul.f32 %v293, %v302
        %v315 = vmul.f32 %v295, %v302
        %v316 = vmul.f32 %v297, %v302
        %v317 = vmul.f32 %v299, %v302
        %v318 = vmul.f32 %v301, %v302
        %v319 = vsub.f32 %v252, %v303
        %v320 = vsub.f32 %v253, %v304
        %v321 = vsub.f32 %v254, %v305
        %v322 = vsub.f32 %v255, %v306
        %v323 = vsub.f32 %v256, %v307
        %v324 = vsub.f32 %v257, %v308
        %v325 = vsub.f32 %v258, %v309
        %v326 = vsub.f32 %v259, %v310
        %v327 = vsub.f32 %v260, %v311
        %v328 = vsub.f32 %v261, %v312
        %v329 = vsub.f32 %v262, %v313
        %v330 = vsub.f32 %v263, %v314
        %v331 = vsub.f32 %v264, %v315
        %v332 = vsub.f32 %v265, %v316
        %v333 = vsub.f32 %v266, %v317
        %v334 = vsub.f32 %v267, %v318
        %v335 = vmul.f32 %v319, %v319
        %v336 = vmul.f32 %v320, %v320
        %v337 = vmul.f32 %v321, %v321
        %v338 = vmul.f32 %v322, %v322
        %v339 = vmul.f32 %v323, %v323
        %v340 = vmul.f32 %v324, %v324
        %v341 = vmul.f32 %v325, %v325
        %v342 = vmul.f32 %v326, %v326
        %v343 = vmul.f32 %v327, %v327
        %v344 = vmul.f32 %v328, %v328
        %v345 = vmul.f32 %v329, %v329
        %v346 = vmul.f32 %v330, %v330
        %v347 = vmul.f32 %v331, %v331
        %v348 = vmul.f32 %v332, %v332
        %v349 = vmul.f32 %v333, %v333
        %v350 = vmul.f32 %v334, %v334
        %351 = vadd.xlane.f32.xlu0 %v335
        %v352 = vpop.xlane.xlu0 %351
        %353 = vadd.xlane.f32.xlu0 %v336
        %v354 = vpop.xlane.xlu0 %353
        %355 = vadd.xlane.f32.xlu0 %v337
        %v356 = vpop.xlane.xlu0 %355
        %357 = vadd.xlane.f32.xlu0 %v338
        %v358 = vpop.xlane.xlu0 %357
        %359 = vadd.xlane.f32.xlu0 %v339
        %v360 = vpop.xlane.xlu0 %359
        %361 = vadd.xlane.f32.xlu0 %v340
        %v362 = vpop.xlane.xlu0 %361
        %363 = vadd.xlane.f32.xlu0 %v341
        %v364 = vpop.xlane.xlu0 %363
        %365 = vadd.xlane.f32.xlu0 %v342
        %v366 = vpop.xlane.xlu0 %365
        %367 = vadd.xlane.f32.xlu0 %v343
        %v368 = vpop.xlane.xlu0 %367
        %369 = vadd.xlane.f32.xlu0 %v344
        %v370 = vpop.xlane.xlu0 %369
        %371 = vadd.xlane.f32.xlu0 %v345
        %v372 = vpop.xlane.xlu0 %371
        %373 = vadd.xlane.f32.xlu0 %v346
        %v374 = vpop.xlane.xlu0 %373
        %375 = vadd.xlane.f32.xlu0 %v347
        %v376 = vpop.xlane.xlu0 %375
        %377 = vadd.xlane.f32.xlu0 %v348
        %v378 = vpop.xlane.xlu0 %377
        %379 = vadd.xlane.f32.xlu0 %v349
        %v380 = vpop.xlane.xlu0 %379
        %381 = vadd.xlane.f32.xlu0 %v350
        %v382 = vpop.xlane.xlu0 %381
        %v383 = vmul.f32 %v352, %v302
        %v384 = vmul.f32 %v354, %v302
        %v385 = vmul.f32 %v356, %v302
        %v386 = vmul.f32 %v358, %v302
        %v387 = vmul.f32 %v360, %v302
        %v388 = vmul.f32 %v362, %v302
        %v389 = vmul.f32 %v364, %v302
        %v390 = vmul.f32 %v366, %v302
        %v391 = vmul.f32 %v368, %v302
        %v392 = vmul.f32 %v370, %v302
        %v393 = vmul.f32 %v372, %v302
        %v394 = vmul.f32 %v374, %v302
        %v395 = vmul.f32 %v376, %v302
        %v396 = vmul.f32 %v378, %v302
        %v397 = vmul.f32 %v380, %v302
        %v398 = vmul.f32 %v382, %v302
        %v399 = vrsqrt.pop %v383
        %v400 = vmul.f32 %v383, %v399
        %vm401 = vcmp.eq.f32.partialorder %v383, inf
        %v402 = vsel %vm401, %v383, %v400
        %vm403 = vcmp.eq.f32.partialorder %v383, 0.0
        %v404 = vand.u32 %v383, 2147483648
        %v405 = vsel %vm403, %v404, %v402
        %v406 = vrsqrt.pop %v384
        %v407 = vmul.f32 %v384, %v406
        %vm408 = vcmp.eq.f32.partialorder %v384, inf
        %v409 = vsel %vm408, %v384, %v407
        %vm410 = vcmp.eq.f32.partialorder %v384, 0.0
        %v411 = vand.u32 %v384, 2147483648
        %v412 = vsel %vm410, %v411, %v409
        %v413 = vrsqrt.pop %v385
        %v414 = vmul.f32 %v385, %v413
        %vm415 = vcmp.eq.f32.partialorder %v385, inf
        %v416 = vsel %vm415, %v385, %v414
        %vm417 = vcmp.eq.f32.partialorder %v385, 0.0
        %v418 = vand.u32 %v385, 2147483648
        %v419 = vsel %vm417, %v418, %v416
        %v420 = vrsqrt.pop %v386
        %v421 = vmul.f32 %v386, %v420
        %vm422 = vcmp.eq.f32.partialorder %v386, inf
        %v423 = vsel %vm422, %v386, %v421
        %vm424 = vcmp.eq.f32.partialorder %v386, 0.0
        %v425 = vand.u32 %v386, 2147483648
        %v426 = vsel %vm424, %v425, %v423
        %v427 = vrsqrt.pop %v387
        %v428 = vmul.f32 %v387, %v427
        %vm429 = vcmp.eq.f32.partialorder %v387, inf
        %v430 = vsel %vm429, %v387, %v428
        %vm431 = vcmp.eq.f32.partialorder %v387, 0.0
        %v432 = vand.u32 %v387, 2147483648
        %v433 = vsel %vm431, %v432, %v430
        %v434 = vrsqrt.pop %v388
        %v435 = vmul.f32 %v388, %v434
        %vm436 = vcmp.eq.f32.partialorder %v388, inf
        %v437 = vsel %vm436, %v388, %v435
        %vm438 = vcmp.eq.f32.partialorder %v388, 0.0
        %v439 = vand.u32 %v388, 2147483648
        %v440 = vsel %vm438, %v439, %v437
        %v441 = vrsqrt.pop %v389
        %v442 = vmul.f32 %v389, %v441
        %vm443 = vcmp.eq.f32.partialorder %v389, inf
        %v444 = vsel %vm443, %v389, %v442
        %vm445 = vcmp.eq.f32.partialorder %v389, 0.0
        %v446 = vand.u32 %v389, 2147483648
        %v447 = vsel %vm445, %v446, %v444
        %v448 = vrsqrt.pop %v390
        %v449 = vmul.f32 %v390, %v448
        %vm450 = vcmp.eq.f32.partialorder %v390, inf
        %v451 = vsel %vm450, %v390, %v449
        %vm452 = vcmp.eq.f32.partialorder %v390, 0.0
        %v453 = vand.u32 %v390, 2147483648
        %v454 = vsel %vm452, %v453, %v451
        %v455 = vrsqrt.pop %v391
        %v456 = vmul.f32 %v391, %v455
        %vm457 = vcmp.eq.f32.partialorder %v391, inf
        %v458 = vsel %vm457, %v391, %v456
        %vm459 = vcmp.eq.f32.partialorder %v391, 0.0
        %v460 = vand.u32 %v391, 2147483648
        %v461 = vsel %vm459, %v460, %v458
        %v462 = vrsqrt.pop %v392
        %v463 = vmul.f32 %v392, %v462
        %vm464 = vcmp.eq.f32.partialorder %v392, inf
        %v465 = vsel %vm464, %v392, %v463
        %vm466 = vcmp.eq.f32.partialorder %v392, 0.0
        %v467 = vand.u32 %v392, 2147483648
        %v468 = vsel %vm466, %v467, %v465
        %v469 = vrsqrt.pop %v393
        %v470 = vmul.f32 %v393, %v469
        %vm471 = vcmp.eq.f32.partialorder %v393, inf
        %v472 = vsel %vm471, %v393, %v470
        %vm473 = vcmp.eq.f32.partialorder %v393, 0.0
        %v474 = vand.u32 %v393, 2147483648
        %v475 = vsel %vm473, %v474, %v472
        %v476 = vrsqrt.pop %v394
        %v477 = vmul.f32 %v394, %v476
        %vm478 = vcmp.eq.f32.partialorder %v394, inf
        %v479 = vsel %vm478, %v394, %v477
        %vm480 = vcmp.eq.f32.partialorder %v394, 0.0
        %v481 = vand.u32 %v394, 2147483648
        %v482 = vsel %vm480, %v481, %v479
        %v483 = vrsqrt.pop %v395
        %v484 = vmul.f32 %v395, %v483
        %vm485 = vcmp.eq.f32.partialorder %v395, inf
        %v486 = vsel %vm485, %v395, %v484
        %vm487 = vcmp.eq.f32.partialorder %v395, 0.0
        %v488 = vand.u32 %v395, 2147483648
        %v489 = vsel %vm487, %v488, %v486
        %v490 = vrsqrt.pop %v396
        %v491 = vmul.f32 %v396, %v490
        %vm492 = vcmp.eq.f32.partialorder %v396, inf
        %v493 = vsel %vm492, %v396, %v491
        %vm494 = vcmp.eq.f32.partialorder %v396, 0.0
        %v495 = vand.u32 %v396, 2147483648
        %v496 = vsel %vm494, %v495, %v493
        %v497 = vrsqrt.pop %v397
        %v498 = vmul.f32 %v397, %v497
        %vm499 = vcmp.eq.f32.partialorder %v397, inf
        %v500 = vsel %vm499, %v397, %v498
        %vm501 = vcmp.eq.f32.partialorder %v397, 0.0
        %v502 = vand.u32 %v397, 2147483648
        %v503 = vsel %vm501, %v502, %v500
        %v504 = vrsqrt.pop %v398
        %v505 = vmul.f32 %v398, %v504
        %vm506 = vcmp.eq.f32.partialorder %v398, inf
        %v507 = vsel %vm506, %v398, %v505
        %vm508 = vcmp.eq.f32.partialorder %v398, 0.0
        %v509 = vand.u32 %v398, 2147483648
        %v510 = vsel %vm508, %v509, %v507
        %v511 = vadd.f32 %v405, 1e-05
        %v512 = vadd.f32 %v412, 1e-05
        %v513 = vadd.f32 %v419, 1e-05
        %v514 = vadd.f32 %v426, 1e-05
        %v515 = vadd.f32 %v433, 1e-05
        %v516 = vadd.f32 %v440, 1e-05
        %v517 = vadd.f32 %v447, 1e-05
        %v518 = vadd.f32 %v454, 1e-05
        %v519 = vadd.f32 %v461, 1e-05
        %v520 = vadd.f32 %v468, 1e-05
        %v521 = vadd.f32 %v475, 1e-05
        %v522 = vadd.f32 %v482, 1e-05
        %v523 = vadd.f32 %v489, 1e-05
        %v524 = vadd.f32 %v496, 1e-05
        %v525 = vadd.f32 %v503, 1e-05
        %v526 = vadd.f32 %v510, 1e-05
        %v527 = vrcp.pop %v511
        %v528 = vmul.f32 %v319, %v527
        %v529 = vrcp.pop %v512
        %v530 = vmul.f32 %v320, %v529
        %v531 = vrcp.pop %v513
        %v532 = vmul.f32 %v321, %v531
        %v533 = vrcp.pop %v514
        %v534 = vmul.f32 %v322, %v533
        %v535 = vrcp.pop %v515
        %v536 = vmul.f32 %v323, %v535
        %v537 = vrcp.pop %v516
        %v538 = vmul.f32 %v324, %v537
        %v539 = vrcp.pop %v517
        %v540 = vmul.f32 %v325, %v539
        %v541 = vrcp.pop %v518
        %v542 = vmul.f32 %v326, %v541
        %v543 = vrcp.pop %v519
        %v544 = vmul.f32 %v327, %v543
        %v545 = vrcp.pop %v520
        %v546 = vmul.f32 %v328, %v545
        %v547 = vrcp.pop %v521
        %v548 = vmul.f32 %v329, %v547
        %v549 = vrcp.pop %v522
        %v550 = vmul.f32 %v330, %v549
        %v551 = vrcp.pop %v523
        %v552 = vmul.f32 %v331, %v551
        %v553 = vrcp.pop %v524
        %v554 = vmul.f32 %v332, %v553
        %v555 = vrcp.pop %v525
        %v556 = vmul.f32 %v333, %v555
        %v557 = vrcp.pop %v526
        %v558 = vmul.f32 %v334, %v557
        %v560 = vlaneseq
        %v561 = vshrl.u32 %v560, 7
        %v562 = vsub.s32 0, %v561
        %v563 = vrot.slane %v268, %v562
        %v565 = vmul.f32 %v528, %v563
        %v566 = vmul.f32 %v530, %v563
        %v567 = vmul.f32 %v532, %v563
        %v568 = vmul.f32 %v534, %v563
        %v569 = vmul.f32 %v536, %v563
        %v570 = vmul.f32 %v538, %v563
        %v571 = vmul.f32 %v540, %v563
        %v572 = vmul.f32 %v542, %v563
        %v573 = vmul.f32 %v544, %v563
        %v574 = vmul.f32 %v546, %v563
        %v575 = vmul.f32 %v548, %v563
        %v576 = vmul.f32 %v550, %v563
        %v577 = vmul.f32 %v552, %v563
        %v578 = vmul.f32 %v554, %v563
        %v579 = vmul.f32 %v556, %v563
        %v580 = vmul.f32 %v558, %v563
        %v582 = vlaneseq
        %v583 = vshrl.u32 %v582, 7
        %v584 = vsub.s32 0, %v583
        %v585 = vrot.slane %v269, %v584
        %v587 = vadd.f32 %v565, %v585
        %v588 = vadd.f32 %v566, %v585
        %v589 = vadd.f32 %v567, %v585
        %v590 = vadd.f32 %v568, %v585
        %v591 = vadd.f32 %v569, %v585
        %v592 = vadd.f32 %v570, %v585
        %v593 = vadd.f32 %v571, %v585
        %v594 = vadd.f32 %v572, %v585
        %v595 = vadd.f32 %v573, %v585
        %v596 = vadd.f32 %v574, %v585
        %v597 = vadd.f32 %v575, %v585
        %v598 = vadd.f32 %v576, %v585
        %v599 = vadd.f32 %v577, %v585
        %v600 = vadd.f32 %v578, %v585
        %v601 = vadd.f32 %v579, %v585
        %v602 = vadd.f32 %v580, %v585
        %v603 = vpack.c.bf16 %v588, %v587
        %v604 = vpack.c.bf16 %v590, %v589
        %v605 = vpack.c.bf16 %v592, %v591
        %v606 = vpack.c.bf16 %v594, %v593
        %v607 = vpack.c.bf16 %v596, %v595
        %v608 = vpack.c.bf16 %v598, %v597
        %v609 = vpack.c.bf16 %v600, %v599
        %v610 = vpack.c.bf16 %v602, %v601
        %v611 = vld [vmem:[#allocation5] sm:$0xff]
        %v612 = vld [vmem:[#allocation5 + $0x8] sm:$0xf]
        %v613 = vld [vmem:[#allocation5 + $0xc] sm:$0xff]
        %v614 = vld [vmem:[#allocation5 + $0x14] sm:$0xf]
        %v615 = vld [vmem:[#allocation5 + $0x18] sm:$0xff]
        %v616 = vld [vmem:[#allocation5 + $0x20] sm:$0xf]
        %v617 = vld [vmem:[#allocation5 + $0x24] sm:$0xff]
        %v618 = vld [vmem:[#allocation5 + $0x2c] sm:$0xf]
        %v619 = vld [vmem:[#allocation5 + $0x30] sm:$0xff]
        %v620 = vld [vmem:[#allocation5 + $0x38] sm:$0xf]
        %v621 = vld [vmem:[#allocation5 + $0x3c] sm:$0xff]
        %v622 = vld [vmem:[#allocation5 + $0x44] sm:$0xf]
        %v623 = vld [vmem:[#allocation5 + $0x48] sm:$0xff]
        %v624 = vld [vmem:[#allocation5 + $0x50] sm:$0xf]
        %v625 = vld [vmem:[#allocation5 + $0x54] sm:$0xff]
        %v626 = vld [vmem:[#allocation5 + $0x5c] sm:$0xf]
        %v627 = vld [vmem:[#allocation5 + $0x60] sm:$0xff]
        %v628 = vld [vmem:[#allocation5 + $0x68] sm:$0xf]
        %v629 = vld [vmem:[#allocation5 + $0x6c] sm:$0xff]
        %v630 = vld [vmem:[#allocation5 + $0x74] sm:$0xf]
        %v631 = vld [vmem:[#allocation5 + $0x78] sm:$0xff]
        %v632 = vld [vmem:[#allocation5 + $0x80] sm:$0xf]
        %v633 = vld [vmem:[#allocation5 + $0x84] sm:$0xff]
        %v634 = vld [vmem:[#allocation5 + $0x8c] sm:$0xf]
        %v635 = vld [vmem:[#allocation5 + $0x90] sm:$0xff]
        %v636 = vld [vmem:[#allocation5 + $0x98] sm:$0xf]
        %v637 = vld [vmem:[#allocation5 + $0x9c] sm:$0xff]
        %v638 = vld [vmem:[#allocation5 + $0xa4] sm:$0xf]
        %v639 = vld [vmem:[#allocation5 + $0xa8] sm:$0xff]
        %v640 = vld [vmem:[#allocation5 + $0xb0] sm:$0xf]
        %v641 = vld [vmem:[#allocation5 + $0xb4] sm:$0xff]
        %v642 = vld [vmem:[#allocation5 + $0xbc] sm:$0xf]
        %v675 = vunpack.c.l.b16 %v611
        %v676 = vunpack.c.h.b16 %v611
        %v677 = vunpack.c.l.b16 %v612
        %v678 = vunpack.c.l.b16 %v613
        %v679 = vunpack.c.h.b16 %v613
        %v680 = vunpack.c.l.b16 %v614
        %v681 = vunpack.c.l.b16 %v615
        %v682 = vunpack.c.h.b16 %v615
        %v683 = vunpack.c.l.b16 %v616
        %v684 = vunpack.c.l.b16 %v617
        %v685 = vunpack.c.h.b16 %v617
        %v686 = vunpack.c.l.b16 %v618
        %v687 = vunpack.c.l.b16 %v619
        %v688 = vunpack.c.h.b16 %v619
        %v689 = vunpack.c.l.b16 %v620
        %v690 = vunpack.c.l.b16 %v621
        %v691 = vunpack.c.h.b16 %v621
        %v692 = vunpack.c.l.b16 %v622
        %v693 = vunpack.c.l.b16 %v623
        %v694 = vunpack.c.h.b16 %v623
        %v695 = vunpack.c.l.b16 %v624
        %v696 = vunpack.c.l.b16 %v625
        %v697 = vunpack.c.h.b16 %v625
        %v698 = vunpack.c.l.b16 %v626
        %v699 = vunpack.c.l.b16 %v627
        %v700 = vunpack.c.h.b16 %v627
        %v701 = vunpack.c.l.b16 %v628
        %v702 = vunpack.c.l.b16 %v629
        %v703 = vunpack.c.h.b16 %v629
        %v704 = vunpack.c.l.b16 %v630
        %v705 = vunpack.c.l.b16 %v631
        %v706 = vunpack.c.h.b16 %v631
        %v707 = vunpack.c.l.b16 %v632
        %v708 = vunpack.c.l.b16 %v633
        %v709 = vunpack.c.h.b16 %v633
        %v710 = vunpack.c.l.b16 %v634
        %v711 = vunpack.c.l.b16 %v635
        %v712 = vunpack.c.h.b16 %v635
        %v713 = vunpack.c.l.b16 %v636
        %v714 = vunpack.c.l.b16 %v637
        %v715 = vunpack.c.h.b16 %v637
        %v716 = vunpack.c.l.b16 %v638
        %v717 = vunpack.c.l.b16 %v639
        %v718 = vunpack.c.h.b16 %v639
        %v719 = vunpack.c.l.b16 %v640
        %v720 = vunpack.c.l.b16 %v641
        %v721 = vunpack.c.h.b16 %v641
        %v722 = vunpack.c.l.b16 %v642
        %v723 = vpack.c.b16 %v678, %v675
        %v724 = vpack.c.b16 %v679, %v676
        %v725 = vpack.c.b16 %v680, %v677
        %v726 = vpack.c.b16 %v684, %v681
        %v727 = vpack.c.b16 %v685, %v682
        %v728 = vpack.c.b16 %v686, %v683
        %v729 = vpack.c.b16 %v690, %v687
        %v730 = vpack.c.b16 %v691, %v688
        %v731 = vpack.c.b16 %v692, %v689
        %v732 = vpack.c.b16 %v696, %v693
        %v733 = vpack.c.b16 %v697, %v694
        %v734 = vpack.c.b16 %v698, %v695
        %v735 = vpack.c.b16 %v702, %v699
        %v736 = vpack.c.b16 %v703, %v700
        %v737 = vpack.c.b16 %v704, %v701
        %v738 = vpack.c.b16 %v708, %v705
        %v739 = vpack.c.b16 %v709, %v706
        %v740 = vpack.c.b16 %v710, %v707
        %v741 = vpack.c.b16 %v714, %v711
        %v742 = vpack.c.b16 %v715, %v712
        %v743 = vpack.c.b16 %v716, %v713
        %v744 = vpack.c.b16 %v720, %v717
        %v745 = vpack.c.b16 %v721, %v718
        %v746 = vpack.c.b16 %v722, %v719
        %771 = vmatprep.subr.bf16.mxu0 %v724
        %772 = vmatpush1.bf16.msra.mxu0 %v723
        %773 = vmatprep.subr.bf16.mxu0 %v727
        %774 = vmatpush1.bf16.msra.mxu0 %v726
        %775 = vmatprep.subr.bf16.mxu0 %v730
        %776 = vmatpush1.bf16.msra.mxu0 %v729
        %777 = vmatprep.subr.bf16.mxu0 %v733
        %778 = vmatpush1.bf16.msra.mxu0 %v732
        %779 = vmatprep.subr.bf16.mxu0 %v736
        %780 = vmatpush1.bf16.msra.mxu0 %v735
        %781 = vmatprep.subr.bf16.mxu0 %v739
        %782 = vmatpush1.bf16.msra.mxu0 %v738
        %783 = vmatprep.subr.bf16.mxu0 %v742
        %784 = vmatpush1.bf16.msra.mxu0 %v741
        %785 = vmatprep.subr.bf16.mxu0 %v745
        %786 = vmatpush1.bf16.msra.mxu0 %v744
        %787 = vmatprep.subr.bf16.mxu0 0
        %788 = vmatpush1.bf16.msra.mxu0 0
        %789 = vmatprep.subr.bf16.mxu0 0
        %790 = vmatpush1.bf16.msra.mxu0 0
        %791 = vmatprep.subr.bf16.mxu0 0
        %792 = vmatpush1.bf16.msra.mxu0 0
        %793 = vmatprep.subr.bf16.mxu0 0
        %794 = vmatpush1.bf16.msra.mxu0 0
        %795 = vmatprep.subr.bf16.mxu0 0
        %796 = vmatpush1.bf16.msra.mxu0 0
        %797 = vmatprep.subr.bf16.mxu0 0
        %798 = vmatpush1.bf16.msra.mxu0 0
        %799 = vmatprep.subr.bf16.mxu0 0
        %800 = vmatpush1.bf16.msra.mxu0 0
        %801 = vmatprep.subr.bf16.mxu0 0
        %802 = vmatpush1.bf16.msra.mxu0 0
        %803 = vmatprep.mubr.bf16.mxu0 0
        %804 = vmatmul.mubr.bf16.gmra.mrb[0].mxu0 %v603
        %v805 = vpop.f32.mrb[0].mxu0
        %v806 = vadd.f32 0.0, %v805
        %v807 = vpop.f32.mrb[0].mxu0
        %v808 = vadd.f32 0.0, %v807
        %v809 = vpop.f32.mrb[0].mxu0
        %v810 = vadd.f32 0.0, %v809
        %v811 = vpop.f32.mrb[0].mxu0
        %v812 = vadd.f32 0.0, %v811
        %813 = vmatprep.mubr.bf16.mxu0 0
        %814 = vmatmul.mubr.bf16.gmra.mrb[0].mxu0 %v604
        %v815 = vpop.f32.mrb[0].mxu0
        %v816 = vadd.f32 0.0, %v815
        %v817 = vpop.f32.mrb[0].mxu0
        %v818 = vadd.f32 0.0, %v817
        %v819 = vpop.f32.mrb[0].mxu0
        %v820 = vadd.f32 0.0, %v819
        %v821 = vpop.f32.mrb[0].mxu0
        %v822 = vadd.f32 0.0, %v821
        %823 = vmatprep.mubr.bf16.mxu0 0
        %824 = vmatmul.mubr.bf16.gmra.mrb[0].mxu0 %v605
        %v825 = vpop.f32.mrb[0].mxu0
        %v826 = vadd.f32 0.0, %v825
        %v827 = vpop.f32.mrb[0].mxu0
        %v828 = vadd.f32 0.0, %v827
        %v829 = vpop.f32.mrb[0].mxu0
        %v830 = vadd.f32 0.0, %v829
        %v831 = vpop.f32.mrb[0].mxu0
        %v832 = vadd.f32 0.0, %v831
        %833 = vmatprep.mubr.bf16.mxu0 0
        %834 = vmatmul.mubr.bf16.gmra.mrb[0].mxu0 %v606
        %v835 = vpop.f32.mrb[0].mxu0
        %v836 = vadd.f32 0.0, %v835
        %v837 = vpop.f32.mrb[0].mxu0
        %v838 = vadd.f32 0.0, %v837
        %v839 = vpop.f32.mrb[0].mxu0
        %v840 = vadd.f32 0.0, %v839
        %v841 = vpop.f32.mrb[0].mxu0
        %v842 = vadd.f32 0.0, %v841
        %843 = vmatprep.mubr.bf16.mxu0 0
        %844 = vmatmul.mubr.bf16.gmra.mrb[0].mxu0 %v607
        %v845 = vpop.f32.mrb[0].mxu0
        %v846 = vadd.f32 0.0, %v845
        %v847 = vpop.f32.mrb[0].mxu0
        %v848 = vadd.f32 0.0, %v847
        %v849 = vpop.f32.mrb[0].mxu0
        %v850 = vadd.f32 0.0, %v849
        %v851 = vpop.f32.mrb[0].mxu0
        %v852 = vadd.f32 0.0, %v851
        %853 = vmatprep.mubr.bf16.mxu0 0
        %854 = vmatmul.mubr.bf16.gmra.mrb[0].mxu0 %v608
        %v855 = vpop.f32.mrb[0].mxu0
        %v856 = vadd.f32 0.0, %v855
        %v857 = vpop.f32.mrb[0].mxu0
        %v858 = vadd.f32 0.0, %v857
        %v859 = vpop.f32.mrb[0].mxu0
        %v860 = vadd.f32 0.0, %v859
        %v861 = vpop.f32.mrb[0].mxu0
        %v862 = vadd.f32 0.0, %v861
        %863 = vmatprep.mubr.bf16.mxu0 0
        %864 = vmatmul.mubr.bf16.gmra.mrb[0].mxu0 %v609
        %v865 = vpop.f32.mrb[0].mxu0
        %v866 = vadd.f32 0.0, %v865
        %v867 = vpop.f32.mrb[0].mxu0
        %v868 = vadd.f32 0.0, %v867
        %v869 = vpop.f32.mrb[0].mxu0
        %v870 = vadd.f32 0.0, %v869
        %v871 = vpop.f32.mrb[0].mxu0
        %v872 = vadd.f32 0.0, %v871
        %873 = vmatprep.mubr.bf16.mxu0 0
        %874 = vmatmul.mubr.bf16.gmra.mrb[0].mxu0 %v610
        %v875 = vpop.f32.mrb[0].mxu0
        %v876 = vadd.f32 0.0, %v875
        %v877 = vpop.f32.mrb[0].mxu0
        %v878 = vadd.f32 0.0, %v877
        %v879 = vpop.f32.mrb[0].mxu0
        %v880 = vadd.f32 0.0, %v879
        %v881 = vpop.f32.mrb[0].mxu0
        %v882 = vadd.f32 0.0, %v881
        %883 = vdwg.mxu0
        %884 = vmatprep.subr.bf16.mxu0 0
        %885 = vmatpush1.bf16.msra.mxu0 %v725
        %886 = vmatprep.subr.bf16.mxu0 0
        %887 = vmatpush1.bf16.msra.mxu0 %v728
        %888 = vmatprep.subr.bf16.mxu0 0
        %889 = vmatpush1.bf16.msra.mxu0 %v731
        %890 = vmatprep.subr.bf16.mxu0 0
        %891 = vmatpush1.bf16.msra.mxu0 %v734
        %892 = vmatprep.subr.bf16.mxu0 0
        %893 = vmatpush1.bf16.msra.mxu0 %v737
        %894 = vmatprep.subr.bf16.mxu0 0
        %895 = vmatpush1.bf16.msra.mxu0 %v740
        %896 = vmatprep.subr.bf16.mxu0 0
        %897 = vmatpush1.bf16.msra.mxu0 %v743
        %898 = vmatprep.subr.bf16.mxu0 0
        %899 = vmatpush1.bf16.msra.mxu0 %v746
        %900 = vmatprep.subr.bf16.mxu0 0
        %901 = vmatpush1.bf16.msra.mxu0 0
        %902 = vmatprep.subr.bf16.mxu0 0
        %903 = vmatpush1.bf16.msra.mxu0 0
        %904 = vmatprep.subr.bf16.mxu0 0
        %905 = vmatpush1.bf16.msra.mxu0 0
        %906 = vmatprep.subr.bf16.mxu0 0
        %907 = vmatpush1.bf16.msra.mxu0 0
        %908 = vmatprep.subr.bf16.mxu0 0
        %909 = vmatpush1.bf16.msra.mxu0 0
        %910 = vmatprep.subr.bf16.mxu0 0
        %911 = vmatpush1.bf16.msra.mxu0 0
        %912 = vmatprep.subr.bf16.mxu0 0
        %913 = vmatpush1.bf16.msra.mxu0 0
        %914 = vmatprep.subr.bf16.mxu0 0
        %915 = vmatpush1.bf16.msra.mxu0 0
        %916 = vmatprep.mubr.bf16.mxu0 0
        %917 = vmatmul.mubr.bf16.gmra.mrb[0].mxu0 %v603
        %v918 = vpop.f32.mrb[0].mxu0
        %v919 = vadd.f32 0.0, %v918
        %v920 = vpop.f32.mrb[0].mxu0
        %v921 = vpop.f32.mrb[0].mxu0
        %v922 = vadd.f32 0.0, %v921
        %v923 = vpop.f32.mrb[0].mxu0
        %924 = vmatprep.mubr.bf16.mxu0 0
        %925 = vmatmul.mubr.bf16.gmra.mrb[0].mxu0 %v604
        %v926 = vpop.f32.mrb[0].mxu0
        %v927 = vadd.f32 0.0, %v926
        %v928 = vpop.f32.mrb[0].mxu0
        %v929 = vpop.f32.mrb[0].mxu0
        %v930 = vadd.f32 0.0, %v929
        %v931 = vpop.f32.mrb[0].mxu0
        %932 = vmatprep.mubr.bf16.mxu0 0
        %933 = vmatmul.mubr.bf16.gmra.mrb[0].mxu0 %v605
        %v934 = vpop.f32.mrb[0].mxu0
        %v935 = vadd.f32 0.0, %v934
        %v936 = vpop.f32.mrb[0].mxu0
        %v937 = vpop.f32.mrb[0].mxu0
        %v938 = vadd.f32 0.0, %v937
        %v939 = vpop.f32.mrb[0].mxu0
        %940 = vmatprep.mubr.bf16.mxu0 0
        %941 = vmatmul.mubr.bf16.gmra.mrb[0].mxu0 %v606
        %v942 = vpop.f32.mrb[0].mxu0
        %v943 = vadd.f32 0.0, %v942
        %v944 = vpop.f32.mrb[0].mxu0
        %v945 = vpop.f32.mrb[0].mxu0
        %v946 = vadd.f32 0.0, %v945
        %v947 = vpop.f32.mrb[0].mxu0
        %948 = vmatprep.mubr.bf16.mxu0 0
        %949 = vmatmul.mubr.bf16.gmra.mrb[0].mxu0 %v607
        %v950 = vpop.f32.mrb[0].mxu0
        %v951 = vadd.f32 0.0, %v950
        %v952 = vpop.f32.mrb[0].mxu0
        %v953 = vpop.f32.mrb[0].mxu0
        %v954 = vadd.f32 0.0, %v953
        %v955 = vpop.f32.mrb[0].mxu0
        %956 = vmatprep.mubr.bf16.mxu0 0
        %957 = vmatmul.mubr.bf16.gmra.mrb[0].mxu0 %v608
        %v958 = vpop.f32.mrb[0].mxu0
        %v959 = vadd.f32 0.0, %v958
        %v960 = vpop.f32.mrb[0].mxu0
        %v961 = vpop.f32.mrb[0].mxu0
        %v962 = vadd.f32 0.0, %v961
        %v963 = vpop.f32.mrb[0].mxu0
        %964 = vmatprep.mubr.bf16.mxu0 0
        %965 = vmatmul.mubr.bf16.gmra.mrb[0].mxu0 %v609
        %v966 = vpop.f32.mrb[0].mxu0
        %v967 = vadd.f32 0.0, %v966
        %v968 = vpop.f32.mrb[0].mxu0
        %v969 = vpop.f32.mrb[0].mxu0
        %v970 = vadd.f32 0.0, %v969
        %v971 = vpop.f32.mrb[0].mxu0
        %972 = vmatprep.mubr.bf16.mxu0 0
        %973 = vmatmul.mubr.bf16.gmra.mrb[0].mxu0 %v610
        %v974 = vpop.f32.mrb[0].mxu0
        %v975 = vadd.f32 0.0, %v974
        %v976 = vpop.f32.mrb[0].mxu0
        %v977 = vpop.f32.mrb[0].mxu0
        %v978 = vadd.f32 0.0, %v977
        %v979 = vpop.f32.mrb[0].mxu0
        %980 = vdwg.mxu0
        %v981 = vpack.c.bf16 %v810, %v806
        %v982 = vpack.c.bf16 %v812, %v808
        %v983 = vpack.c.bf16 %v922, %v919
        %v984 = vpack.c.bf16 %v820, %v816
        %v985 = vpack.c.bf16 %v822, %v818
        %v986 = vpack.c.bf16 %v930, %v927
        %v987 = vpack.c.bf16 %v830, %v826
        %v988 = vpack.c.bf16 %v832, %v828
        %v989 = vpack.c.bf16 %v938, %v935
        %v990 = vpack.c.bf16 %v840, %v836
        %v991 = vpack.c.bf16 %v842, %v838
        %v992 = vpack.c.bf16 %v946, %v943
        %v993 = vpack.c.bf16 %v850, %v846
        %v994 = vpack.c.bf16 %v852, %v848
        %v995 = vpack.c.bf16 %v954, %v951
        %v996 = vpack.c.bf16 %v860, %v856
        %v997 = vpack.c.bf16 %v862, %v858
        %v998 = vpack.c.bf16 %v962, %v959
        %v999 = vpack.c.bf16 %v870, %v866
        %v1000 = vpack.c.bf16 %v872, %v868
        %v1001 = vpack.c.bf16 %v970, %v967
        %v1002 = vpack.c.bf16 %v880, %v876
        %v1003 = vpack.c.bf16 %v882, %v878
        %v1004 = vpack.c.bf16 %v978, %v975
        %v1029 = vunpack.c.l.b16 %v981
        %v1030 = vunpack.c.l.b16 %v982
        %v1031 = vunpack.c.l.b16 %v983
        %v1032 = vunpack.c.h.b16 %v981
        %v1033 = vunpack.c.h.b16 %v982
        %v1034 = vunpack.c.h.b16 %v983
        %v1035 = vunpack.c.l.b16 %v984
        %v1036 = vunpack.c.l.b16 %v985
        %v1037 = vunpack.c.l.b16 %v986
        %v1038 = vunpack.c.h.b16 %v984
        %v1039 = vunpack.c.h.b16 %v985
        %v1040 = vunpack.c.h.b16 %v986
        %v1041 = vunpack.c.l.b16 %v987
        %v1042 = vunpack.c.l.b16 %v988
        %v1043 = vunpack.c.l.b16 %v989
        %v1044 = vunpack.c.h.b16 %v987
        %v1045 = vunpack.c.h.b16 %v988
        %v1046 = vunpack.c.h.b16 %v989
        %v1047 = vunpack.c.l.b16 %v990
        %v1048 = vunpack.c.l.b16 %v991
        %v1049 = vunpack.c.l.b16 %v992
        %v1050 = vunpack.c.h.b16 %v990
        %v1051 = vunpack.c.h.b16 %v991
        %v1052 = vunpack.c.h.b16 %v992
        %v1053 = vunpack.c.l.b16 %v993
        %v1054 = vunpack.c.l.b16 %v994
        %v1055 = vunpack.c.l.b16 %v995
        %v1056 = vunpack.c.h.b16 %v993
        %v1057 = vunpack.c.h.b16 %v994
        %v1058 = vunpack.c.h.b16 %v995
        %v1059 = vunpack.c.l.b16 %v996
        %v1060 = vunpack.c.l.b16 %v997
        %v1061 = vunpack.c.l.b16 %v998
        %v1062 = vunpack.c.h.b16 %v996
        %v1063 = vunpack.c.h.b16 %v997
        %v1064 = vunpack.c.h.b16 %v998
        %v1065 = vunpack.c.l.b16 %v999
        %v1066 = vunpack.c.l.b16 %v1000
        %v1067 = vunpack.c.l.b16 %v1001
        %v1068 = vunpack.c.h.b16 %v999
        %v1069 = vunpack.c.h.b16 %v1000
        %v1070 = vunpack.c.h.b16 %v1001
        %v1071 = vunpack.c.l.b16 %v1002
        %v1072 = vunpack.c.l.b16 %v1003
        %v1073 = vunpack.c.l.b16 %v1004
        %v1074 = vunpack.c.h.b16 %v1002
        %v1075 = vunpack.c.h.b16 %v1003
        %v1076 = vunpack.c.h.b16 %v1004
        %v1077 = vpack.c.b16 %v1030, %v1029
        %v1078 = vpack.c.b16 %v1031, %v1031
        %v1079 = vpack.c.b16 %v1033, %v1032
        %v1080 = vpack.c.b16 %v1034, %v1034
        %v1081 = vpack.c.b16 %v1036, %v1035
        %v1082 = vpack.c.b16 %v1037, %v1037
        %v1083 = vpack.c.b16 %v1039, %v1038
        %v1084 = vpack.c.b16 %v1040, %v1040
        %v1085 = vpack.c.b16 %v1042, %v1041
        %v1086 = vpack.c.b16 %v1043, %v1043
        %v1087 = vpack.c.b16 %v1045, %v1044
        %v1088 = vpack.c.b16 %v1046, %v1046
        %v1089 = vpack.c.b16 %v1048, %v1047
        %v1090 = vpack.c.b16 %v1049, %v1049
        %v1091 = vpack.c.b16 %v1051, %v1050
        %v1092 = vpack.c.b16 %v1052, %v1052
        %v1093 = vpack.c.b16 %v1054, %v1053
        %v1094 = vpack.c.b16 %v1055, %v1055
        %v1095 = vpack.c.b16 %v1057, %v1056
        %v1096 = vpack.c.b16 %v1058, %v1058
        %v1097 = vpack.c.b16 %v1060, %v1059
        %v1098 = vpack.c.b16 %v1061, %v1061
        %v1099 = vpack.c.b16 %v1063, %v1062
        %v1100 = vpack.c.b16 %v1064, %v1064
        %v1101 = vpack.c.b16 %v1066, %v1065
        %v1102 = vpack.c.b16 %v1067, %v1067
        %v1103 = vpack.c.b16 %v1069, %v1068
        %v1104 = vpack.c.b16 %v1070, %v1070
        %v1105 = vpack.c.b16 %v1072, %v1071
        %v1106 = vpack.c.b16 %v1073, %v1073
        %v1107 = vpack.c.b16 %v1075, %v1074
        %v1108 = vpack.c.b16 %v1076, %v1076
        %1141 = vst [vmem:[%s248] sm:$0xff] %v1077
        %1142 = vst [vmem:[%s248 + $0x8] sm:$0xf] %v1078
        %1143 = vst [vmem:[%s248 + $0xc] sm:$0xff] %v1079
        %1144 = vst [vmem:[%s248 + $0x14] sm:$0xf] %v1080
        %1145 = vst [vmem:[%s248 + $0x18] sm:$0xff] %v1081
        %1146 = vst [vmem:[%s248 + $0x20] sm:$0xf] %v1082
        %1147 = vst [vmem:[%s248 + $0x24] sm:$0xff] %v1083
        %1148 = vst [vmem:[%s248 + $0x2c] sm:$0xf] %v1084
        %1149 = vst [vmem:[%s248 + $0x30] sm:$0xff] %v1085
        %1150 = vst [vmem:[%s248 + $0x38] sm:$0xf] %v1086
        %1151 = vst [vmem:[%s248 + $0x3c] sm:$0xff] %v1087
        %1152 = vst [vmem:[%s248 + $0x44] sm:$0xf] %v1088
        %1153 = vst [vmem:[%s248 + $0x48] sm:$0xff] %v1089
        %1154 = vst [vmem:[%s248 + $0x50] sm:$0xf] %v1090
        %1155 = vst [vmem:[%s248 + $0x54] sm:$0xff] %v1091
        %1156 = vst [vmem:[%s248 + $0x5c] sm:$0xf] %v1092
        %1157 = vst [vmem:[%s248 + $0x60] sm:$0xff] %v1093
        %1158 = vst [vmem:[%s248 + $0x68] sm:$0xf] %v1094
        %1159 = vst [vmem:[%s248 + $0x6c] sm:$0xff] %v1095
        %1160 = vst [vmem:[%s248 + $0x74] sm:$0xf] %v1096
        %1161 = vst [vmem:[%s248 + $0x78] sm:$0xff] %v1097
        %1162 = vst [vmem:[%s248 + $0x80] sm:$0xf] %v1098
        %1163 = vst [vmem:[%s248 + $0x84] sm:$0xff] %v1099
        %1164 = vst [vmem:[%s248 + $0x8c] sm:$0xf] %v1100
        %1165 = vst [vmem:[%s248 + $0x90] sm:$0xff] %v1101
        %1166 = vst [vmem:[%s248 + $0x98] sm:$0xf] %v1102
        %1167 = vst [vmem:[%s248 + $0x9c] sm:$0xff] %v1103
        %1168 = vst [vmem:[%s248 + $0xa4] sm:$0xf] %v1104
        %1169 = vst [vmem:[%s248 + $0xa8] sm:$0xff] %v1105
        %1170 = vst [vmem:[%s248 + $0xb0] sm:$0xf] %v1106
        %1171 = vst [vmem:[%s248 + $0xb4] sm:$0xff] %v1107
        %1172 = vst [vmem:[%s248 + $0xbc] sm:$0xf] %v1108
        %s1173 = sand.u32 %s135, 1
        %s1174 = scalar_lea.sflag [#allocation4], %s1173
        %s1175 = sand.u32 %s135, 1
        %s1176 = smul.addr %s1175, 192
        %s1177 = scalar_lea.vmem [#allocation7], %s1176
        // Predicated region
        $region45: #{tpu_custom_call.1} parent=35 // pred_check
          %p1178 = pneg %p145
        $region46: #{tpu_custom_call.1} parent=35 // pred_check_branch
          %1180 = sbr.rel (%p1178) target = $region48
        $region47: #{tpu_custom_call.1} parent=35 // pred_region
          %s1181 = smul.u32 16, %s27
          %s1183 = ssub.s32 3072, 3072
          %1184 = vsyncadd %s1174, %s1183
          %s1185 = smul.addr %s1181, 3
          %s1186 = smul.addr %s26, 96
          %s1187 = sadd.s32 %s1185, %s1186
          %s1188 = smul.addr %s1187, 64
          %s1189 = scalar_lea.hbm %s4, %s1188
          %s1190 = sshll.u32 %s1177, 4
          %s1191 = int_to_ptr.vmem [resolvable:$true] %s1190
          %1196 = dma.vmem_to_hbm [thread:$0]  %s1191, 3072, %s1189, %s1174, 192, 192, 12
        $region48: #{tpu_custom_call.1} parent=35 // pred_fallthru
          _
      $region36: #{tpu_custom_call.1} parent=5 // pred_fallthru
        _
      %p1197 = scmp.le.s32.totalorder 2, %s17
      // Predicated region
      $region49: #{tpu_custom_call.1} parent=5 // pred_check
        %p1198 = pneg %p1197
      $region50: #{tpu_custom_call.1} parent=5 // pred_check_branch
        %1200 = sbr.rel (%p1198) target = $region52
      $region51: #{tpu_custom_call.1} parent=5 // pred_region
        %s1201 = ssub.s32 %s17, 2
        // Predicated region
        $region53: #{tpu_custom_call.1} parent=51 // pred_check
          %p1202 = pneg %p151
        $region54: #{tpu_custom_call.1} parent=51 // pred_check_branch
          %1204 = sbr.rel (%p1202) target = $region56
        $region55: #{tpu_custom_call.1} parent=51 // pred_region
          %s1205 = sand.u32 %s136, 1
          %s1206 = scalar_lea.sflag [#allocation4], %s1205
          %s1207 = sand.u32 %s136, 1
          %s1208 = smul.addr %s1207, 192
          %s1209 = scalar_lea.vmem [#allocation7], %s1208
          %1210 = dma.done %s1206, 3072
        $region56: #{tpu_custom_call.1} parent=51 // pred_fallthru
          _
      $region52: #{tpu_custom_call.1} parent=5 // pred_fallthru
        _
    $region6: #{tpu_custom_call.1} parent=1 // loop_footer
      %s21 = sadd.s32 1, %s17
    $region7: #{tpu_custom_call.1} parent=1 // loop_footer_branch
      %16 = sbr.rel target = $region3
    $region8: #{tpu_custom_call.1} parent=1 // loop_exit
      _
    %1211 = vsyncpa [#allocation3], 1
    %s1212 = scalar_lea.sflag [#allocation3], 1
    %1213 = vsyncpa %s1212, 1
    %1214 = vsyncpa [#allocation6], 1
    %1215 = vsyncpa [#allocation4], 1
    %s1216 = scalar_lea.sflag [#allocation4], 1
    %1217 = vsyncpa %s1216, 1

// kernel: tpu_custom_call.1
$region0: #{tpu_custom_call.1}
  #allocation0 [shape = 'u32[]', space=smem, size = 0x4, offset = 0x4, fixed_abs, tag = 'smem constant byte address 0x4 - core index']
  #allocation1 [shape = 'u32[144,128]{1,0:T(1,128)}', space=vmem, size = 0x12000, scoped, tag = 'internal scratch']
  %s0 = inlined_call_operand.hbm [shape: f32[2,256,128], index: 0, kind: input, shape index: {}]
  %s1 = inlined_call_operand.vmem [shape: f32[1,128], index: 1, kind: input, shape index: {}]
  %s2 = inlined_call_operand.vmem [shape: f32[1,128], index: 2, kind: input, shape index: {}]
  %s3 = inlined_call_operand.hbm [shape: bf16[128,384], index: 3, kind: input, shape index: {}]
  %s4 = inlined_call_operand.hbm [shape: bf16[2,256,384], index: 4, kind: output, shape index: {}]
  %s5 = sld [smem:[#allocation0]]
  $region57: #{tpu_custom_call.1} parent=0
    _
  %s7 = ssub.s32 1, %s5
  %s8 = scalar_select 0, %s7, %s5
  $region1: #{tpu_custom_call.1} parent=0
    #allocation2 [shape = 'u8[131072]{0}', space=vmem, size = 0x20000, scoped, tag = 'input window, operand 0']
    #allocation3 [shape = 's32[2]{0}', space=sflag, size = 0x8, scoped, tag = 'scoped memory for tpu_custom_call.1']
    #allocation4 [shape = 's32[2]{0}', space=sflag, size = 0x8, scoped, tag = 'scoped memory for tpu_custom_call.1']
    #allocation5 [shape = 'u8[98304]{0}', space=vmem, size = 0x18000, scoped, tag = 'input window, operand 3, single buffered']
    #allocation6 [shape = 's32[1]{0}', space=sflag, size = 0x4, scoped, tag = 'scoped memory for tpu_custom_call.1']
    #allocation7 [shape = 'u8[196608]{0}', space=vmem, size = 0x30000, scoped, tag = 'output window, operand 0']
    %9 = vsyncpa [#allocation3], 0
    %s10 = scalar_lea.sflag [#allocation3], 1
    %11 = vsyncpa %s10, 0
    %12 = vsyncpa [#allocation6], 0
    %13 = vsyncpa [#allocation4], 0
    %s14 = scalar_lea.sflag [#allocation4], 1
    %15 = vsyncpa %s14, 0
    loop: start=0, step=1, limit=6
    $region2: #{tpu_custom_call.1} parent=1 // loop_pre_header
      _
    $region3: #{tpu_custom_call.1} parent=1 // loop_header
      %s17 = sphi 0, %s21
      %p18 = scmp.ge.s32.totalorder %s17, 6
      %s24 = sphi 0, %s36
      %s25 = sphi 0, %s32
      %s26 = sphi 0, %s24
      %s27 = sphi 0, %s25
      %s28 = sphi 0, %s26
      %s29 = sphi 0, %s27
      %s41 = sphi 0, %s43
      %s44 = sphi 0, %s41
      %s45 = sphi 0, %s44
      %s61 = sphi 0, %s45
      %s65 = sphi 0, %s65
      %s67 = sphi 0, %s65
      %s68 = sphi 0, %s67
      %s82 = sphi 0, %s68
      %s86 = sphi 0, %s86
      %s88 = sphi 0, %s86
      %s89 = sphi 0, %s88
      %s103 = sphi 0, %s89
      %s107 = sphi 0, %s107
      %s109 = sphi 0, %s107
      %s110 = sphi 0, %s109
      %s124 = sphi 0, %s110
      %s132 = sphi 0, %s134
      %s135 = sphi 0, %s132
      %s136 = sphi 0, %s135
      %s152 = sphi 0, %s136
    $region4: #{tpu_custom_call.1} parent=1 // loop_header_branch
      %20 = sbr.rel (%p18) target = $region8
    $region5: #{tpu_custom_call.1} parent=1 // loop_body
      %s22 = ssub.s32 %s17, 1
      %s23 = ssub.s32 %s17, 2
      %s30 = sadd.s32 1, %s25
      %p31 = scmp.ge.s32.totalorder %s30, 2
      %s32 = scalar_select %p31, 0, %s30
      %s33 = sadd.s32 1, %s24
      %s34 = scalar_select %p31, %s33, %s24
      %p35 = scmp.ge.s32.totalorder %s34, 2
      %s36 = scalar_select %p35, 0, %s34
      %s37 = ssub.s32 %s24, %s36
      %s38 = ssub.s32 %s25, %s32
      %s39 = sor.u32 %s37, %s38
      %p40 = scmp.eq.s32.totalorder %s39, 0
      %s42 = sadd.s32 %s41, 1
      %s43 = scalar_select %p40, %s41, %s42
      %p46 = pneg %p40
      %p47 = scmp.eq.s32.totalorder %s17, 3
      %p48 = por %p46, %p47
      %p49 = scmp.ne.s32.totalorder %s41, %s44
      %p50 = scmp.eq.s32.totalorder %s17, 0
      %p51 = por %p49, %p50
      %p52 = scmp.ne.s32.totalorder %s41, %s44
      %p53 = scmp.eq.s32.totalorder %s22, 3
      %p54 = por %p52, %p53
      %p55 = scmp.ne.s32.totalorder %s44, %s45
      %p56 = scmp.eq.s32.totalorder %s22, 0
      %p57 = por %p55, %p56
      %p58 = scmp.ne.s32.totalorder %s44, %s45
      %p59 = scmp.eq.s32.totalorder %s23, 3
      %p60 = por %p58, %p59
      %p62 = scmp.ne.s32.totalorder %s45, %s61
      %p63 = scmp.eq.s32.totalorder %s23, 0
      %p64 = por %p62, %p63
      %s66 = sadd.s32 %s65, 1
      %p69 = scmp.eq.s32.totalorder %s17, 3
      %p70 = scmp.ne.s32.totalorder %s65, %s67
      %p71 = scmp.eq.s32.totalorder %s17, 0
      %p72 = por %p70, %p71
      %p73 = scmp.ne.s32.totalorder %s65, %s67
      %p74 = scmp.eq.s32.totalorder %s22, 3
      %p75 = por %p73, %p74
      %p76 = scmp.ne.s32.totalorder %s67, %s68
      %p77 = scmp.eq.s32.totalorder %s22, 0
      %p78 = por %p76, %p77
      %p79 = scmp.ne.s32.totalorder %s67, %s68
      %p80 = scmp.eq.s32.totalorder %s23, 3
      %p81 = por %p79, %p80
      %p83 = scmp.ne.s32.totalorder %s68, %s82
      %p84 = scmp.eq.s32.totalorder %s23, 0
      %p85 = por %p83, %p84
      %s87 = sadd.s32 %s86, 1
      %p90 = scmp.eq.s32.totalorder %s17, 3
      %p91 = scmp.ne.s32.totalorder %s86, %s88
      %p92 = scmp.eq.s32.totalorder %s17, 0
      %p93 = por %p91, %p92
      %p94 = scmp.ne.s32.totalorder %s86, %s88
      %p95 = scmp.eq.s32.totalorder %s22, 3
      %p96 = por %p94, %p95
      %p97 = scmp.ne.s32.totalorder %s88, %s89
      %p98 = scmp.eq.s32.totalorder %s22, 0
      %p99 = por %p97, %p98
      %p100 = scmp.ne.s32.totalorder %s88, %s89
      %p101 = scmp.eq.s32.totalorder %s23, 3
      %p102 = por %p100, %p101
      %p104 = scmp.ne.s32.totalorder %s89, %s103
      %p105 = scmp.eq.s32.totalorder %s23, 0
      %p106 = por %p104, %p105
      %s108 = sadd.s32 %s107, 1
      %p111 = scmp.eq.s32.totalorder %s17, 3
      %p112 = scmp.ne.s32.totalorder %s107, %s109
      %p113 = scmp.eq.s32.totalorder %s17, 0
      %p114 = por %p112, %p113
      %p115 = scmp.ne.s32.totalorder %s107, %s109
      %p116 = scmp.eq.s32.totalorder %s22, 3
      %p117 = por %p115, %p116
      %p118 = scmp.ne.s32.totalorder %s109, %s110
      %p119 = scmp.eq.s32.totalorder %s22, 0
      %p120 = por %p118, %p119
      %p121 = scmp.ne.s32.totalorder %s109, %s110
      %p122 = scmp.eq.s32.totalorder %s23, 3
      %p123 = por %p121, %p122
      %p125 = scmp.ne.s32.totalorder %s110, %s124
      %p126 = scmp.eq.s32.totalorder %s23, 0
      %p127 = por %p125, %p126
      %s128 = ssub.s32 %s24, %s36
      %s129 = ssub.s32 %s25, %s32
      %s130 = sor.u32 %s128, %s129
      %p131 = scmp.eq.s32.totalorder %s130, 0
      %s133 = sadd.s32 %s132, 1
      %s134 = scalar_select %p131, %s132, %s133
      %p137 = pneg %p131
      %p138 = scmp.eq.s32.totalorder %s17, 3
      %p139 = por %p137, %p138
      %p140 = scmp.ne.s32.totalorder %s132, %s135
      %p141 = scmp.eq.s32.totalorder %s17, 0
      %p142 = por %p140, %p141
      %p143 = scmp.ne.s32.totalorder %s132, %s135
      %p144 = scmp.eq.s32.totalorder %s22, 3
      %p145 = por %p143, %p144
      %p146 = scmp.ne.s32.totalorder %s135, %s136
      %p147 = scmp.eq.s32.totalorder %s22, 0
      %p148 = por %p146, %p147
      %p149 = scmp.ne.s32.totalorder %s135, %s136
      %p150 = scmp.eq.s32.totalorder %s23, 3
      %p151 = por %p149, %p150
      %p153 = scmp.ne.s32.totalorder %s136, %s152
      %p154 = scmp.eq.s32.totalorder %s23, 0
      %p155 = por %p153, %p154
      %p156 = scmp.le.s32.totalorder 1, %s17
      %p157 = scmp.lt.s32.totalorder %s17, 5
      %p158 = pnand %p156, %p157
      %p159 = pneg %p158
      // Predicated region
      $region9: #{tpu_custom_call.1} parent=5 // pred_check
        _
      $region10: #{tpu_custom_call.1} parent=5 // pred_check_branch
        %161 = sbr.rel (%p158) target = $region12
      $region11: #{tpu_custom_call.1} parent=5 // pred_region
        %s162 = ssub.s32 %s17, 1
        // Predicated region
        $region13: #{tpu_custom_call.1} parent=11 // pred_check
          %p163 = pneg %p78
        $region14: #{tpu_custom_call.1} parent=11 // pred_check_branch
          %165 = sbr.rel (%p163) target = $region16
        $region15: #{tpu_custom_call.1} parent=11 // pred_region
          _
        $region16: #{tpu_custom_call.1} parent=11 // pred_fallthru
          _
        // Predicated region
        $region17: #{tpu_custom_call.1} parent=11 // pred_check
          %p166 = pneg %p99
        $region18: #{tpu_custom_call.1} parent=11 // pred_check_branch
          %168 = sbr.rel (%p166) target = $region20
        $region19: #{tpu_custom_call.1} parent=11 // pred_region
          _
        $region20: #{tpu_custom_call.1} parent=11 // pred_fallthru
          _
        // Predicated region
        $region21: #{tpu_custom_call.1} parent=11 // pred_check
          %p169 = pneg %p120
        $region22: #{tpu_custom_call.1} parent=11 // pred_check_branch
          %171 = sbr.rel (%p169) target = $region24
        $region23: #{tpu_custom_call.1} parent=11 // pred_region
          %s173 = ssub.s32 3072, 3072
          %174 = vsyncadd [#allocation6], %s173
          %s175 = sshll.u32 [#allocation5], 4
          %s176 = int_to_ptr.vmem [resolvable:$true] %s175
          %181 = dma.hbm_to_vmem [thread:$0]  %s3, 3072, %s176, [#allocation6], 192, 192, 12
        $region24: #{tpu_custom_call.1} parent=11 // pred_fallthru
          _
      $region12: #{tpu_custom_call.1} parent=5 // pred_fallthru
        _
      %p182 = scmp.lt.s32.totalorder %s17, 4
      // Predicated region
      $region25: #{tpu_custom_call.1} parent=5 // pred_check
        %p183 = pneg %p182
      $region26: #{tpu_custom_call.1} parent=5 // pred_check_branch
        %185 = sbr.rel (%p183) target = $region28
      $region27: #{tpu_custom_call.1} parent=5 // pred_region
        // Predicated region
        $region29: #{tpu_custom_call.1} parent=27 // pred_check
          %p186 = pneg %p51
        $region30: #{tpu_custom_call.1} parent=27 // pred_check_branch
          %188 = sbr.rel (%p186) target = $region32
        $region31: #{tpu_custom_call.1} parent=27 // pred_region
          %s189 = sand.u32 %s41, 1
          %s190 = scalar_lea.sflag [#allocation3], %s189
          %s191 = sand.u32 %s41, 1
          %s192 = smul.addr %s191, 128
          %s193 = scalar_lea.vmem [#allocation2], %s192
          %s194 = smul.u32 16, %s25
          %s196 = ssub.s32 2048, 2048
          %197 = vsyncadd %s190, %s196
          %s198 = smul.addr %s24, 32
          %s199 = sadd.s32 %s194, %s198
          %s200 = smul.addr %s199, 128
          %s201 = scalar_lea.hbm %s0, %s200
          %s202 = sshll.u32 %s193, 4
          %s203 = int_to_ptr.vmem [resolvable:$true] %s202
          %208 = dma.hbm_to_vmem [thread:$0]  %s201, 2048, %s203, %s190, 128, 128, 8
        $region32: #{tpu_custom_call.1} parent=27 // pred_fallthru
          _
      $region28: #{tpu_custom_call.1} parent=5 // pred_fallthru
        _
      %p209 = scmp.le.s32.totalorder 1, %s17
      %p210 = scmp.lt.s32.totalorder %s17, 5
      %p211 = pnand %p209, %p210
      %p212 = pneg %p211
      // Predicated region
      $region33: #{tpu_custom_call.1} parent=5 // pred_check
        _
      $region34: #{tpu_custom_call.1} parent=5 // pred_check_branch
        %214 = sbr.rel (%p211) target = $region36
      $region35: #{tpu_custom_call.1} parent=5 // pred_region
        %s215 = ssub.s32 %s17, 1
        %s216 = sand.u32 %s44, 1
        %s217 = scalar_lea.sflag [#allocation3], %s216
        %s218 = sand.u32 %s44, 1
        %s219 = smul.addr %s218, 128
        %s220 = scalar_lea.vmem [#allocation2], %s219
        // Predicated region
        $region37: #{tpu_custom_call.1} parent=35 // pred_check
          %p221 = pneg %p57
        $region38: #{tpu_custom_call.1} parent=35 // pred_check_branch
          %223 = sbr.rel (%p221) target = $region40
        $region39: #{tpu_custom_call.1} parent=35 // pred_region
          %224 = dma.done %s217, 2048
        $region40: #{tpu_custom_call.1} parent=35 // pred_fallthru
          _
        // Predicated region
        $region41: #{tpu_custom_call.1} parent=35 // pred_check
          %p225 = pneg %p120
        $region42: #{tpu_custom_call.1} parent=35 // pred_check_branch
          %227 = sbr.rel (%p225) target = $region44
        $region43: #{tpu_custom_call.1} parent=35 // pred_region
          %228 = dma.done [#allocation6], 3072
        $region44: #{tpu_custom_call.1} parent=35 // pred_fallthru
          _
        %s229 = sand.u32 %s44, 1
        %s230 = scalar_lea.sflag [#allocation3], %s229
        %s231 = sand.u32 %s44, 1
        %s232 = smul.addr %s231, 128
        %s233 = scalar_lea.vmem [#allocation2], %s232
        %p234 = pneg %p57
        %p235 = pneg %p54
        %p236 = pneg %p78
        %p237 = pneg %p75
        %p238 = pneg %p99
        %p239 = pneg %p96
        %p240 = pneg %p120
        %p241 = pneg %p117
        %p242 = pneg %p148
        %p243 = pneg %p145
        %s244 = sand.u32 %s135, 1
        %s245 = scalar_lea.sflag [#allocation4], %s244
        %s246 = sand.u32 %s135, 1
        %s247 = smul.addr %s246, 192
        %s248 = scalar_lea.vmem [#allocation7], %s247
        %s249 = smul.u32 16, %s27
        %s250 = smul.u32 16, %s27
        %v252 = vld [vmem:[%s220] sm:$0xff]
        %v253 = vld [vmem:[%s220 + $0x8] sm:$0xff]
        %v254 = vld [vmem:[%s220 + $0x10] sm:$0xff]
        %v255 = vld [vmem:[%s220 + $0x18] sm:$0xff]
        %v256 = vld [vmem:[%s220 + $0x20] sm:$0xff]
        %v257 = vld [vmem:[%s220 + $0x28] sm:$0xff]
        %v258 = vld [vmem:[%s220 + $0x30] sm:$0xff]
        %v259 = vld [vmem:[%s220 + $0x38] sm:$0xff]
        %v260 = vld [vmem:[%s220 + $0x40] sm:$0xff]
        %v261 = vld [vmem:[%s220 + $0x48] sm:$0xff]
        %v262 = vld [vmem:[%s220 + $0x50] sm:$0xff]
        %v263 = vld [vmem:[%s220 + $0x58] sm:$0xff]
        %v264 = vld [vmem:[%s220 + $0x60] sm:$0xff]
        %v265 = vld [vmem:[%s220 + $0x68] sm:$0xff]
        %v266 = vld [vmem:[%s220 + $0x70] sm:$0xff]
        %v267 = vld [vmem:[%s220 + $0x78] sm:$0xff]
        %v268 = vld [vmem:[%s1] sm:$0x1]
        %v269 = vld [vmem:[%s2] sm:$0x1]
        %270 = vadd.xlane.f32.xlu0 %v252
        %v271 = vpop.xlane.xlu0 %270
        %272 = vadd.xlane.f32.xlu0 %v253
        %v273 = vpop.xlane.xlu0 %272
        %274 = vadd.xlane.f32.xlu0 %v254
        %v275 = vpop.xlane.xlu0 %274
        %276 = vadd.xlane.f32.xlu0 %v255
        %v277 = vpop.xlane.xlu0 %276
        %278 = vadd.xlane.f32.xlu0 %v256
        %v279 = vpop.xlane.xlu0 %278
        %280 = vadd.xlane.f32.xlu0 %v257
        %v281 = vpop.xlane.xlu0 %280
        %282 = vadd.xlane.f32.xlu0 %v258
        %v283 = vpop.xlane.xlu0 %282
        %284 = vadd.xlane.f32.xlu0 %v259
        %v285 = vpop.xlane.xlu0 %284
        %286 = vadd.xlane.f32.xlu0 %v260
        %v287 = vpop.xlane.xlu0 %286
        %288 = vadd.xlane.f32.xlu0 %v261
        %v289 = vpop.xlane.xlu0 %288
        %290 = vadd.xlane.f32.xlu0 %v262
        %v291 = vpop.xlane.xlu0 %290
        %292 = vadd.xlane.f32.xlu0 %v263
        %v293 = vpop.xlane.xlu0 %292
        %294 = vadd.xlane.f32.xlu0 %v264
        %v295 = vpop.xlane.xlu0 %294
        %296 = vadd.xlane.f32.xlu0 %v265
        %v297 = vpop.xlane.xlu0 %296
        %298 = vadd.xlane.f32.xlu0 %v266
        %v299 = vpop.xlane.xlu0 %298
        %300 = vadd.xlane.f32.xlu0 %v267
        %v301 = vpop.xlane.xlu0 %300
        %v302 = vrcp.pop 128.0
        %v303 = vmul.f32 %v271, %v302
        %v304 = vmul.f32 %v273, %v302
        %v305 = vmul.f32 %v275, %v302
        %v306 = vmul.f32 %v277, %v302
        %v307 = vmul.f32 %v279, %v302
        %v308 = vmul.f32 %v281, %v302
        %v309 = vmul.f32 %v283, %v302
        %v310 = vmul.f32 %v285, %v302
        %v311 = vmul.f32 %v287, %v302
        %v312 = vmul.f32 %v289, %v302
        %v313 = vmul.f32 %v291, %v302
        %v314 = vmul.f32 %v293, %v302
        %v315 = vmul.f32 %v295, %v302
        %v316 = vmul.f32 %v297, %v302
        %v317 = vmul.f32 %v299, %v302
        %v318 = vmul.f32 %v301, %v302
        %v319 = vsub.f32 %v252, %v303
        %v320 = vsub.f32 %v253, %v304
        %v321 = vsub.f32 %v254, %v305
        %v322 = vsub.f32 %v255, %v306
        %v323 = vsub.f32 %v256, %v307
        %v324 = vsub.f32 %v257, %v308
        %v325 = vsub.f32 %v258, %v309
        %v326 = vsub.f32 %v259, %v310
        %v327 = vsub.f32 %v260, %v311
        %v328 = vsub.f32 %v261, %v312
        %v329 = vsub.f32 %v262, %v313
        %v330 = vsub.f32 %v263, %v314
        %v331 = vsub.f32 %v264, %v315
        %v332 = vsub.f32 %v265, %v316
        %v333 = vsub.f32 %v266, %v317
        %v334 = vsub.f32 %v267, %v318
        %v335 = vmul.f32 %v319, %v319
        %v336 = vmul.f32 %v320, %v320
        %v337 = vmul.f32 %v321, %v321
        %v338 = vmul.f32 %v322, %v322
        %v339 = vmul.f32 %v323, %v323
        %v340 = vmul.f32 %v324, %v324
        %v341 = vmul.f32 %v325, %v325
        %v342 = vmul.f32 %v326, %v326
        %v343 = vmul.f32 %v327, %v327
        %v344 = vmul.f32 %v328, %v328
        %v345 = vmul.f32 %v329, %v329
        %v346 = vmul.f32 %v330, %v330
        %v347 = vmul.f32 %v331, %v331
        %v348 = vmul.f32 %v332, %v332
        %v349 = vmul.f32 %v333, %v333
        %v350 = vmul.f32 %v334, %v334
        %351 = vadd.xlane.f32.xlu0 %v335
        %v352 = vpop.xlane.xlu0 %351
        %353 = vadd.xlane.f32.xlu0 %v336
        %v354 = vpop.xlane.xlu0 %353
        %355 = vadd.xlane.f32.xlu0 %v337
        %v356 = vpop.xlane.xlu0 %355
        %357 = vadd.xlane.f32.xlu0 %v338
        %v358 = vpop.xlane.xlu0 %357
        %359 = vadd.xlane.f32.xlu0 %v339
        %v360 = vpop.xlane.xlu0 %359
        %361 = vadd.xlane.f32.xlu0 %v340
        %v362 = vpop.xlane.xlu0 %361
        %363 = vadd.xlane.f32.xlu0 %v341
        %v364 = vpop.xlane.xlu0 %363
        %365 = vadd.xlane.f32.xlu0 %v342
        %v366 = vpop.xlane.xlu0 %365
        %367 = vadd.xlane.f32.xlu0 %v343
        %v368 = vpop.xlane.xlu0 %367
        %369 = vadd.xlane.f32.xlu0 %v344
        %v370 = vpop.xlane.xlu0 %369
        %371 = vadd.xlane.f32.xlu0 %v345
        %v372 = vpop.xlane.xlu0 %371
        %373 = vadd.xlane.f32.xlu0 %v346
        %v374 = vpop.xlane.xlu0 %373
        %375 = vadd.xlane.f32.xlu0 %v347
        %v376 = vpop.xlane.xlu0 %375
        %377 = vadd.xlane.f32.xlu0 %v348
        %v378 = vpop.xlane.xlu0 %377
        %379 = vadd.xlane.f32.xlu0 %v349
        %v380 = vpop.xlane.xlu0 %379
        %381 = vadd.xlane.f32.xlu0 %v350
        %v382 = vpop.xlane.xlu0 %381
        %v383 = vmul.f32 %v352, %v302
        %v384 = vmul.f32 %v354, %v302
        %v385 = vmul.f32 %v356, %v302
        %v386 = vmul.f32 %v358, %v302
        %v387 = vmul.f32 %v360, %v302
        %v388 = vmul.f32 %v362, %v302
        %v389 = vmul.f32 %v364, %v302
        %v390 = vmul.f32 %v366, %v302
        %v391 = vmul.f32 %v368, %v302
        %v392 = vmul.f32 %v370, %v302
        %v393 = vmul.f32 %v372, %v302
        %v394 = vmul.f32 %v374, %v302
        %v395 = vmul.f32 %v376, %v302
        %v396 = vmul.f32 %v378, %v302
        %v397 = vmul.f32 %v380, %v302
        %v398 = vmul.f32 %v382, %v302
        %v399 = vrsqrt.pop %v383
        %v400 = vmul.f32 %v383, %v399
        %vm401 = vcmp.eq.f32.partialorder %v383, inf
        %v402 = vsel %vm401, %v383, %v400
        %vm403 = vcmp.eq.f32.partialorder %v383, 0.0
        %v404 = vand.u32 %v383, 2147483648
        %v405 = vsel %vm403, %v404, %v402
        %v406 = vrsqrt.pop %v384
        %v407 = vmul.f32 %v384, %v406
        %vm408 = vcmp.eq.f32.partialorder %v384, inf
        %v409 = vsel %vm408, %v384, %v407
        %vm410 = vcmp.eq.f32.partialorder %v384, 0.0
        %v411 = vand.u32 %v384, 2147483648
        %v412 = vsel %vm410, %v411, %v409
        %v413 = vrsqrt.pop %v385
        %v414 = vmul.f32 %v385, %v413
        %vm415 = vcmp.eq.f32.partialorder %v385, inf
        %v416 = vsel %vm415, %v385, %v414
        %vm417 = vcmp.eq.f32.partialorder %v385, 0.0
        %v418 = vand.u32 %v385, 2147483648
        %v419 = vsel %vm417, %v418, %v416
        %v420 = vrsqrt.pop %v386
        %v421 = vmul.f32 %v386, %v420
        %vm422 = vcmp.eq.f32.partialorder %v386, inf
        %v423 = vsel %vm422, %v386, %v421
        %vm424 = vcmp.eq.f32.partialorder %v386, 0.0
        %v425 = vand.u32 %v386, 2147483648
        %v426 = vsel %vm424, %v425, %v423
        %v427 = vrsqrt.pop %v387
        %v428 = vmul.f32 %v387, %v427
        %vm429 = vcmp.eq.f32.partialorder %v387, inf
        %v430 = vsel %vm429, %v387, %v428
        %vm431 = vcmp.eq.f32.partialorder %v387, 0.0
        %v432 = vand.u32 %v387, 2147483648
        %v433 = vsel %vm431, %v432, %v430
        %v434 = vrsqrt.pop %v388
        %v435 = vmul.f32 %v388, %v434
        %vm436 = vcmp.eq.f32.partialorder %v388, inf
        %v437 = vsel %vm436, %v388, %v435
        %vm438 = vcmp.eq.f32.partialorder %v388, 0.0
        %v439 = vand.u32 %v388, 2147483648
        %v440 = vsel %vm438, %v439, %v437
        %v441 = vrsqrt.pop %v389
        %v442 = vmul.f32 %v389, %v441
        %vm443 = vcmp.eq.f32.partialorder %v389, inf
        %v444 = vsel %vm443, %v389, %v442
        %vm445 = vcmp.eq.f32.partialorder %v389, 0.0
        %v446 = vand.u32 %v389, 2147483648
        %v447 = vsel %vm445, %v446, %v444
        %v448 = vrsqrt.pop %v390
        %v449 = vmul.f32 %v390, %v448
        %vm450 = vcmp.eq.f32.partialorder %v390, inf
        %v451 = vsel %vm450, %v390, %v449
        %vm452 = vcmp.eq.f32.partialorder %v390, 0.0
        %v453 = vand.u32 %v390, 2147483648
        %v454 = vsel %vm452, %v453, %v451
        %v455 = vrsqrt.pop %v391
        %v456 = vmul.f32 %v391, %v455
        %vm457 = vcmp.eq.f32.partialorder %v391, inf
        %v458 = vsel %vm457, %v391, %v456
        %vm459 = vcmp.eq.f32.partialorder %v391, 0.0
        %v460 = vand.u32 %v391, 2147483648
        %v461 = vsel %vm459, %v460, %v458
        %v462 = vrsqrt.pop %v392
        %v463 = vmul.f32 %v392, %v462
        %vm464 = vcmp.eq.f32.partialorder %v392, inf
        %v465 = vsel %vm464, %v392, %v463
        %vm466 = vcmp.eq.f32.partialorder %v392, 0.0
        %v467 = vand.u32 %v392, 2147483648
        %v468 = vsel %vm466, %v467, %v465
        %v469 = vrsqrt.pop %v393
        %v470 = vmul.f32 %v393, %v469
        %vm471 = vcmp.eq.f32.partialorder %v393, inf
        %v472 = vsel %vm471, %v393, %v470
        %vm473 = vcmp.eq.f32.partialorder %v393, 0.0
        %v474 = vand.u32 %v393, 2147483648
        %v475 = vsel %vm473, %v474, %v472
        %v476 = vrsqrt.pop %v394
        %v477 = vmul.f32 %v394, %v476
        %vm478 = vcmp.eq.f32.partialorder %v394, inf
        %v479 = vsel %vm478, %v394, %v477
        %vm480 = vcmp.eq.f32.partialorder %v394, 0.0
        %v481 = vand.u32 %v394, 2147483648
        %v482 = vsel %vm480, %v481, %v479
        %v483 = vrsqrt.pop %v395
        %v484 = vmul.f32 %v395, %v483
        %vm485 = vcmp.eq.f32.partialorder %v395, inf
        %v486 = vsel %vm485, %v395, %v484
        %vm487 = vcmp.eq.f32.partialorder %v395, 0.0
        %v488 = vand.u32 %v395, 2147483648
        %v489 = vsel %vm487, %v488, %v486
        %v490 = vrsqrt.pop %v396
        %v491 = vmul.f32 %v396, %v490
        %vm492 = vcmp.eq.f32.partialorder %v396, inf
        %v493 = vsel %vm492, %v396, %v491
        %vm494 = vcmp.eq.f32.partialorder %v396, 0.0
        %v495 = vand.u32 %v396, 2147483648
        %v496 = vsel %vm494, %v495, %v493
        %v497 = vrsqrt.pop %v397
        %v498 = vmul.f32 %v397, %v497
        %vm499 = vcmp.eq.f32.partialorder %v397, inf
        %v500 = vsel %vm499, %v397, %v498
        %vm501 = vcmp.eq.f32.partialorder %v397, 0.0
        %v502 = vand.u32 %v397, 2147483648
        %v503 = vsel %vm501, %v502, %v500
        %v504 = vrsqrt.pop %v398
        %v505 = vmul.f32 %v398, %v504
        %vm506 = vcmp.eq.f32.partialorder %v398, inf
        %v507 = vsel %vm506, %v398, %v505
        %vm508 = vcmp.eq.f32.partialorder %v398, 0.0
        %v509 = vand.u32 %v398, 2147483648
        %v510 = vsel %vm508, %v509, %v507
        %v511 = vadd.f32 %v405, 1e-05
        %v512 = vadd.f32 %v412, 1e-05
        %v513 = vadd.f32 %v419, 1e-05
        %v514 = vadd.f32 %v426, 1e-05
        %v515 = vadd.f32 %v433, 1e-05
        %v516 = vadd.f32 %v440, 1e-05
        %v517 = vadd.f32 %v447, 1e-05
        %v518 = vadd.f32 %v454, 1e-05
        %v519 = vadd.f32 %v461, 1e-05
        %v520 = vadd.f32 %v468, 1e-05
        %v521 = vadd.f32 %v475, 1e-05
        %v522 = vadd.f32 %v482, 1e-05
        %v523 = vadd.f32 %v489, 1e-05
        %v524 = vadd.f32 %v496, 1e-05
        %v525 = vadd.f32 %v503, 1e-05
        %v526 = vadd.f32 %v510, 1e-05
        %v527 = vrcp.pop %v511
        %v528 = vmul.f32 %v319, %v527
        %v529 = vrcp.pop %v512
        %v530 = vmul.f32 %v320, %v529
        %v531 = vrcp.pop %v513
        %v532 = vmul.f32 %v321, %v531
        %v533 = vrcp.pop %v514
        %v534 = vmul.f32 %v322, %v533
        %v535 = vrcp.pop %v515
        %v536 = vmul.f32 %v323, %v535
        %v537 = vrcp.pop %v516
        %v538 = vmul.f32 %v324, %v537
        %v539 = vrcp.pop %v517
        %v540 = vmul.f32 %v325, %v539
        %v541 = vrcp.pop %v518
        %v542 = vmul.f32 %v326, %v541
        %v543 = vrcp.pop %v519
        %v544 = vmul.f32 %v327, %v543
        %v545 = vrcp.pop %v520
        %v546 = vmul.f32 %v328, %v545
        %v547 = vrcp.pop %v521
        %v548 = vmul.f32 %v329, %v547
        %v549 = vrcp.pop %v522
        %v550 = vmul.f32 %v330, %v549
        %v551 = vrcp.pop %v523
        %v552 = vmul.f32 %v331, %v551
        %v553 = vrcp.pop %v524
        %v554 = vmul.f32 %v332, %v553
        %v555 = vrcp.pop %v525
        %v556 = vmul.f32 %v333, %v555
        %v557 = vrcp.pop %v526
        %v558 = vmul.f32 %v334, %v557
        %v560 = vlaneseq
        %v561 = vshrl.u32 %v560, 7
        %v562 = vsub.s32 0, %v561
        %v563 = vrot.slane %v268, %v562
        %v565 = vmul.f32 %v528, %v563
        %v566 = vmul.f32 %v530, %v563
        %v567 = vmul.f32 %v532, %v563
        %v568 = vmul.f32 %v534, %v563
        %v569 = vmul.f32 %v536, %v563
        %v570 = vmul.f32 %v538, %v563
        %v571 = vmul.f32 %v540, %v563
        %v572 = vmul.f32 %v542, %v563
        %v573 = vmul.f32 %v544, %v563
        %v574 = vmul.f32 %v546, %v563
        %v575 = vmul.f32 %v548, %v563
        %v576 = vmul.f32 %v550, %v563
        %v577 = vmul.f32 %v552, %v563
        %v578 = vmul.f32 %v554, %v563
        %v579 = vmul.f32 %v556, %v563
        %v580 = vmul.f32 %v558, %v563
        %v582 = vlaneseq
        %v583 = vshrl.u32 %v582, 7
        %v584 = vsub.s32 0, %v583
        %v585 = vrot.slane %v269, %v584
        %v587 = vadd.f32 %v565, %v585
        %v588 = vadd.f32 %v566, %v585
        %v589 = vadd.f32 %v567, %v585
        %v590 = vadd.f32 %v568, %v585
        %v591 = vadd.f32 %v569, %v585
        %v592 = vadd.f32 %v570, %v585
        %v593 = vadd.f32 %v571, %v585
        %v594 = vadd.f32 %v572, %v585
        %v595 = vadd.f32 %v573, %v585
        %v596 = vadd.f32 %v574, %v585
        %v597 = vadd.f32 %v575, %v585
        %v598 = vadd.f32 %v576, %v585
        %v599 = vadd.f32 %v577, %v585
        %v600 = vadd.f32 %v578, %v585
        %v601 = vadd.f32 %v579, %v585
        %v602 = vadd.f32 %v580, %v585
        %v603 = vpack.c.bf16 %v588, %v587
        %v604 = vpack.c.bf16 %v590, %v589
        %v605 = vpack.c.bf16 %v592, %v591
        %v606 = vpack.c.bf16 %v594, %v593
        %v607 = vpack.c.bf16 %v596, %v595
        %v608 = vpack.c.bf16 %v598, %v597
        %v609 = vpack.c.bf16 %v600, %v599
        %v610 = vpack.c.bf16 %v602, %v601
        %v611 = vld [vmem:[#allocation5] sm:$0xff]
        %v612 = vld [vmem:[#allocation5 + $0x8] sm:$0xf]
        %v613 = vld [vmem:[#allocation5 + $0xc] sm:$0xff]
        %v614 = vld [vmem:[#allocation5 + $0x14] sm:$0xf]
        %v615 = vld [vmem:[#allocation5 + $0x18] sm:$0xff]
        %v616 = vld [vmem:[#allocation5 + $0x20] sm:$0xf]
        %v617 = vld [vmem:[#allocation5 + $0x24] sm:$0xff]
        %v618 = vld [vmem:[#allocation5 + $0x2c] sm:$0xf]
        %v619 = vld [vmem:[#allocation5 + $0x30] sm:$0xff]
        %v620 = vld [vmem:[#allocation5 + $0x38] sm:$0xf]
        %v621 = vld [vmem:[#allocation5 + $0x3c] sm:$0xff]
        %v622 = vld [vmem:[#allocation5 + $0x44] sm:$0xf]
        %v623 = vld [vmem:[#allocation5 + $0x48] sm:$0xff]
        %v624 = vld [vmem:[#allocation5 + $0x50] sm:$0xf]
        %v625 = vld [vmem:[#allocation5 + $0x54] sm:$0xff]
        %v626 = vld [vmem:[#allocation5 + $0x5c] sm:$0xf]
        %v627 = vld [vmem:[#allocation5 + $0x60] sm:$0xff]
        %v628 = vld [vmem:[#allocation5 + $0x68] sm:$0xf]
        %v629 = vld [vmem:[#allocation5 + $0x6c] sm:$0xff]
        %v630 = vld [vmem:[#allocation5 + $0x74] sm:$0xf]
        %v631 = vld [vmem:[#allocation5 + $0x78] sm:$0xff]
        %v632 = vld [vmem:[#allocation5 + $0x80] sm:$0xf]
        %v633 = vld [vmem:[#allocation5 + $0x84] sm:$0xff]
        %v634 = vld [vmem:[#allocation5 + $0x8c] sm:$0xf]
        %v635 = vld [vmem:[#allocation5 + $0x90] sm:$0xff]
        %v636 = vld [vmem:[#allocation5 + $0x98] sm:$0xf]
        %v637 = vld [vmem:[#allocation5 + $0x9c] sm:$0xff]
        %v638 = vld [vmem:[#allocation5 + $0xa4] sm:$0xf]
        %v639 = vld [vmem:[#allocation5 + $0xa8] sm:$0xff]
        %v640 = vld [vmem:[#allocation5 + $0xb0] sm:$0xf]
        %v641 = vld [vmem:[#allocation5 + $0xb4] sm:$0xff]
        %v642 = vld [vmem:[#allocation5 + $0xbc] sm:$0xf]
        %v675 = vunpack.c.l.b16 %v611
        %v676 = vunpack.c.h.b16 %v611
        %v677 = vunpack.c.l.b16 %v612
        %v678 = vunpack.c.l.b16 %v613
        %v679 = vunpack.c.h.b16 %v613
        %v680 = vunpack.c.l.b16 %v614
        %v681 = vunpack.c.l.b16 %v615
        %v682 = vunpack.c.h.b16 %v615
        %v683 = vunpack.c.l.b16 %v616
        %v684 = vunpack.c.l.b16 %v617
        %v685 = vunpack.c.h.b16 %v617
        %v686 = vunpack.c.l.b16 %v618
        %v687 = vunpack.c.l.b16 %v619
        %v688 = vunpack.c.h.b16 %v619
        %v689 = vunpack.c.l.b16 %v620
        %v690 = vunpack.c.l.b16 %v621
        %v691 = vunpack.c.h.b16 %v621
        %v692 = vunpack.c.l.b16 %v622
        %v693 = vunpack.c.l.b16 %v623
        %v694 = vunpack.c.h.b16 %v623
        %v695 = vunpack.c.l.b16 %v624
        %v696 = vunpack.c.l.b16 %v625
        %v697 = vunpack.c.h.b16 %v625
        %v698 = vunpack.c.l.b16 %v626
        %v699 = vunpack.c.l.b16 %v627
        %v700 = vunpack.c.h.b16 %v627
        %v701 = vunpack.c.l.b16 %v628
        %v702 = vunpack.c.l.b16 %v629
        %v703 = vunpack.c.h.b16 %v629
        %v704 = vunpack.c.l.b16 %v630
        %v705 = vunpack.c.l.b16 %v631
        %v706 = vunpack.c.h.b16 %v631
        %v707 = vunpack.c.l.b16 %v632
        %v708 = vunpack.c.l.b16 %v633
        %v709 = vunpack.c.h.b16 %v633
        %v710 = vunpack.c.l.b16 %v634
        %v711 = vunpack.c.l.b16 %v635
        %v712 = vunpack.c.h.b16 %v635
        %v713 = vunpack.c.l.b16 %v636
        %v714 = vunpack.c.l.b16 %v637
        %v715 = vunpack.c.h.b16 %v637
        %v716 = vunpack.c.l.b16 %v638
        %v717 = vunpack.c.l.b16 %v639
        %v718 = vunpack.c.h.b16 %v639
        %v719 = vunpack.c.l.b16 %v640
        %v720 = vunpack.c.l.b16 %v641
        %v721 = vunpack.c.h.b16 %v641
        %v722 = vunpack.c.l.b16 %v642
        %v723 = vpack.c.b16 %v678, %v675
        %v724 = vpack.c.b16 %v679, %v676
        %v725 = vpack.c.b16 %v680, %v677
        %v726 = vpack.c.b16 %v684, %v681
        %v727 = vpack.c.b16 %v685, %v682
        %v728 = vpack.c.b16 %v686, %v683
        %v729 = vpack.c.b16 %v690, %v687
        %v730 = vpack.c.b16 %v691, %v688
        %v731 = vpack.c.b16 %v692, %v689
        %v732 = vpack.c.b16 %v696, %v693
        %v733 = vpack.c.b16 %v697, %v694
        %v734 = vpack.c.b16 %v698, %v695
        %v735 = vpack.c.b16 %v702, %v699
        %v736 = vpack.c.b16 %v703, %v700
        %v737 = vpack.c.b16 %v704, %v701
        %v738 = vpack.c.b16 %v708, %v705
        %v739 = vpack.c.b16 %v709, %v706
        %v740 = vpack.c.b16 %v710, %v707
        %v741 = vpack.c.b16 %v714, %v711
        %v742 = vpack.c.b16 %v715, %v712
        %v743 = vpack.c.b16 %v716, %v713
        %v744 = vpack.c.b16 %v720, %v717
        %v745 = vpack.c.b16 %v721, %v718
        %v746 = vpack.c.b16 %v722, %v719
        %771 = vmatprep.subr.bf16.mxu0 %v724
        %772 = vmatpush1.bf16.msra.mxu0 %v723
        %773 = vmatprep.subr.bf16.mxu0 %v727
        %774 = vmatpush1.bf16.msra.mxu0 %v726
        %775 = vmatprep.subr.bf16.mxu0 %v730
        %776 = vmatpush1.bf16.msra.mxu0 %v729
        %777 = vmatprep.subr.bf16.mxu0 %v733
        %778 = vmatpush1.bf16.msra.mxu0 %v732
        %779 = vmatprep.subr.bf16.mxu0 %v736
        %780 = vmatpush1.bf16.msra.mxu0 %v735
        %781 = vmatprep.subr.bf16.mxu0 %v739
        %782 = vmatpush1.bf16.msra.mxu0 %v738
        %783 = vmatprep.subr.bf16.mxu0 %v742
        %784 = vmatpush1.bf16.msra.mxu0 %v741
        %785 = vmatprep.subr.bf16.mxu0 %v745
        %786 = vmatpush1.bf16.msra.mxu0 %v744
        %787 = vmatprep.subr.bf16.mxu0 0
        %788 = vmatpush1.bf16.msra.mxu0 0
        %789 = vmatprep.subr.bf16.mxu0 0
        %790 = vmatpush1.bf16.msra.mxu0 0
        %791 = vmatprep.subr.bf16.mxu0 0
        %792 = vmatpush1.bf16.msra.mxu0 0
        %793 = vmatprep.subr.bf16.mxu0 0
        %794 = vmatpush1.bf16.msra.mxu0 0
        %795 = vmatprep.subr.bf16.mxu0 0
        %796 = vmatpush1.bf16.msra.mxu0 0
        %797 = vmatprep.subr.bf16.mxu0 0
        %798 = vmatpush1.bf16.msra.mxu0 0
        %799 = vmatprep.subr.bf16.mxu0 0
        %800 = vmatpush1.bf16.msra.mxu0 0
        %801 = vmatprep.subr.bf16.mxu0 0
        %802 = vmatpush1.bf16.msra.mxu0 0
        %803 = vmatprep.mubr.bf16.mxu0 0
        %804 = vmatmul.mubr.bf16.gmra.mrb[0].mxu0 %v603
        %v805 = vpop.f32.mrb[0].mxu0
        %v806 = vadd.f32 0.0, %v805
        %v807 = vpop.f32.mrb[0].mxu0
        %v808 = vadd.f32 0.0, %v807
        %v809 = vpop.f32.mrb[0].mxu0
        %v810 = vadd.f32 0.0, %v809
        %v811 = vpop.f32.mrb[0].mxu0
        %v812 = vadd.f32 0.0, %v811
        %813 = vmatprep.mubr.bf16.mxu0 0
        %814 = vmatmul.mubr.bf16.gmra.mrb[0].mxu0 %v604
        %v815 = vpop.f32.mrb[0].mxu0
        %v816 = vadd.f32 0.0, %v815
        %v817 = vpop.f32.mrb[0].mxu0
        %v818 = vadd.f32 0.0, %v817
        %v819 = vpop.f32.mrb[0].mxu0
        %v820 = vadd.f32 0.0, %v819
        %v821 = vpop.f32.mrb[0].mxu0
        %v822 = vadd.f32 0.0, %v821
        %823 = vmatprep.mubr.bf16.mxu0 0
        %824 = vmatmul.mubr.bf16.gmra.mrb[0].mxu0 %v605
        %v825 = vpop.f32.mrb[0].mxu0
        %v826 = vadd.f32 0.0, %v825
        %v827 = vpop.f32.mrb[0].mxu0
        %v828 = vadd.f32 0.0, %v827
        %v829 = vpop.f32.mrb[0].mxu0
        %v830 = vadd.f32 0.0, %v829
        %v831 = vpop.f32.mrb[0].mxu0
        %v832 = vadd.f32 0.0, %v831
        %833 = vmatprep.mubr.bf16.mxu0 0
        %834 = vmatmul.mubr.bf16.gmra.mrb[0].mxu0 %v606
        %v835 = vpop.f32.mrb[0].mxu0
        %v836 = vadd.f32 0.0, %v835
        %v837 = vpop.f32.mrb[0].mxu0
        %v838 = vadd.f32 0.0, %v837
        %v839 = vpop.f32.mrb[0].mxu0
        %v840 = vadd.f32 0.0, %v839
        %v841 = vpop.f32.mrb[0].mxu0
        %v842 = vadd.f32 0.0, %v841
        %843 = vmatprep.mubr.bf16.mxu0 0
        %844 = vmatmul.mubr.bf16.gmra.mrb[0].mxu0 %v607
        %v845 = vpop.f32.mrb[0].mxu0
        %v846 = vadd.f32 0.0, %v845
        %v847 = vpop.f32.mrb[0].mxu0
        %v848 = vadd.f32 0.0, %v847
        %v849 = vpop.f32.mrb[0].mxu0
        %v850 = vadd.f32 0.0, %v849
        %v851 = vpop.f32.mrb[0].mxu0
        %v852 = vadd.f32 0.0, %v851
        %853 = vmatprep.mubr.bf16.mxu0 0
        %854 = vmatmul.mubr.bf16.gmra.mrb[0].mxu0 %v608
        %v855 = vpop.f32.mrb[0].mxu0
        %v856 = vadd.f32 0.0, %v855
        %v857 = vpop.f32.mrb[0].mxu0
        %v858 = vadd.f32 0.0, %v857
        %v859 = vpop.f32.mrb[0].mxu0
        %v860 = vadd.f32 0.0, %v859
        %v861 = vpop.f32.mrb[0].mxu0
        %v862 = vadd.f32 0.0, %v861
        %863 = vmatprep.mubr.bf16.mxu0 0
        %864 = vmatmul.mubr.bf16.gmra.mrb[0].mxu0 %v609
        %v865 = vpop.f32.mrb[0].mxu0
        %v866 = vadd.f32 0.0, %v865
        %v867 = vpop.f32.mrb[0].mxu0
        %v868 = vadd.f32 0.0, %v867
        %v869 = vpop.f32.mrb[0].mxu0
        %v870 = vadd.f32 0.0, %v869
        %v871 = vpop.f32.mrb[0].mxu0
        %v872 = vadd.f32 0.0, %v871
        %873 = vmatprep.mubr.bf16.mxu0 0
        %874 = vmatmul.mubr.bf16.gmra.mrb[0].mxu0 %v610
        %v875 = vpop.f32.mrb[0].mxu0
        %v876 = vadd.f32 0.0, %v875
        %v877 = vpop.f32.mrb[0].mxu0
        %v878 = vadd.f32 0.0, %v877
        %v879 = vpop.f32.mrb[0].mxu0
        %v880 = vadd.f32 0.0, %v879
        %v881 = vpop.f32.mrb[0].mxu0
        %v882 = vadd.f32 0.0, %v881
        %883 = vdwg.mxu0
        %884 = vmatprep.subr.bf16.mxu0 0
        %885 = vmatpush1.bf16.msra.mxu0 %v725
        %886 = vmatprep.subr.bf16.mxu0 0
        %887 = vmatpush1.bf16.msra.mxu0 %v728
        %888 = vmatprep.subr.bf16.mxu0 0
        %889 = vmatpush1.bf16.msra.mxu0 %v731
        %890 = vmatprep.subr.bf16.mxu0 0
        %891 = vmatpush1.bf16.msra.mxu0 %v734
        %892 = vmatprep.subr.bf16.mxu0 0
        %893 = vmatpush1.bf16.msra.mxu0 %v737
        %894 = vmatprep.subr.bf16.mxu0 0
        %895 = vmatpush1.bf16.msra.mxu0 %v740
        %896 = vmatprep.subr.bf16.mxu0 0
        %897 = vmatpush1.bf16.msra.mxu0 %v743
        %898 = vmatprep.subr.bf16.mxu0 0
        %899 = vmatpush1.bf16.msra.mxu0 %v746
        %900 = vmatprep.subr.bf16.mxu0 0
        %901 = vmatpush1.bf16.msra.mxu0 0
        %902 = vmatprep.subr.bf16.mxu0 0
        %903 = vmatpush1.bf16.msra.mxu0 0
        %904 = vmatprep.subr.bf16.mxu0 0
        %905 = vmatpush1.bf16.msra.mxu0 0
        %906 = vmatprep.subr.bf16.mxu0 0
        %907 = vmatpush1.bf16.msra.mxu0 0
        %908 = vmatprep.subr.bf16.mxu0 0
        %909 = vmatpush1.bf16.msra.mxu0 0
        %910 = vmatprep.subr.bf16.mxu0 0
        %911 = vmatpush1.bf16.msra.mxu0 0
        %912 = vmatprep.subr.bf16.mxu0 0
        %913 = vmatpush1.bf16.msra.mxu0 0
        %914 = vmatprep.subr.bf16.mxu0 0
        %915 = vmatpush1.bf16.msra.mxu0 0
        %916 = vmatprep.mubr.bf16.mxu0 0
        %917 = vmatmul.mubr.bf16.gmra.mrb[0].mxu0 %v603
        %v918 = vpop.f32.mrb[0].mxu0
        %v919 = vadd.f32 0.0, %v918
        %v920 = vpop.f32.mrb[0].mxu0
        %v921 = vpop.f32.mrb[0].mxu0
        %v922 = vadd.f32 0.0, %v921
        %v923 = vpop.f32.mrb[0].mxu0
        %924 = vmatprep.mubr.bf16.mxu0 0
        %925 = vmatmul.mubr.bf16.gmra.mrb[0].mxu0 %v604
        %v926 = vpop.f32.mrb[0].mxu0
        %v927 = vadd.f32 0.0, %v926
        %v928 = vpop.f32.mrb[0].mxu0
        %v929 = vpop.f32.mrb[0].mxu0
        %v930 = vadd.f32 0.0, %v929
        %v931 = vpop.f32.mrb[0].mxu0
        %932 = vmatprep.mubr.bf16.mxu0 0
        %933 = vmatmul.mubr.bf16.gmra.mrb[0].mxu0 %v605
        %v934 = vpop.f32.mrb[0].mxu0
        %v935 = vadd.f32 0.0, %v934
        %v936 = vpop.f32.mrb[0].mxu0
        %v937 = vpop.f32.mrb[0].mxu0
        %v938 = vadd.f32 0.0, %v937
        %v939 = vpop.f32.mrb[0].mxu0
        %940 = vmatprep.mubr.bf16.mxu0 0
        %941 = vmatmul.mubr.bf16.gmra.mrb[0].mxu0 %v606
        %v942 = vpop.f32.mrb[0].mxu0
        %v943 = vadd.f32 0.0, %v942
        %v944 = vpop.f32.mrb[0].mxu0
        %v945 = vpop.f32.mrb[0].mxu0
        %v946 = vadd.f32 0.0, %v945
        %v947 = vpop.f32.mrb[0].mxu0
        %948 = vmatprep.mubr.bf16.mxu0 0
        %949 = vmatmul.mubr.bf16.gmra.mrb[0].mxu0 %v607
        %v950 = vpop.f32.mrb[0].mxu0
        %v951 = vadd.f32 0.0, %v950
        %v952 = vpop.f32.mrb[0].mxu0
        %v953 = vpop.f32.mrb[0].mxu0
        %v954 = vadd.f32 0.0, %v953
        %v955 = vpop.f32.mrb[0].mxu0
        %956 = vmatprep.mubr.bf16.mxu0 0
        %957 = vmatmul.mubr.bf16.gmra.mrb[0].mxu0 %v608
        %v958 = vpop.f32.mrb[0].mxu0
        %v959 = vadd.f32 0.0, %v958
        %v960 = vpop.f32.mrb[0].mxu0
        %v961 = vpop.f32.mrb[0].mxu0
        %v962 = vadd.f32 0.0, %v961
        %v963 = vpop.f32.mrb[0].mxu0
        %964 = vmatprep.mubr.bf16.mxu0 0
        %965 = vmatmul.mubr.bf16.gmra.mrb[0].mxu0 %v609
        %v966 = vpop.f32.mrb[0].mxu0
        %v967 = vadd.f32 0.0, %v966
        %v968 = vpop.f32.mrb[0].mxu0
        %v969 = vpop.f32.mrb[0].mxu0
        %v970 = vadd.f32 0.0, %v969
        %v971 = vpop.f32.mrb[0].mxu0
        %972 = vmatprep.mubr.bf16.mxu0 0
        %973 = vmatmul.mubr.bf16.gmra.mrb[0].mxu0 %v610
        %v974 = vpop.f32.mrb[0].mxu0
        %v975 = vadd.f32 0.0, %v974
        %v976 = vpop.f32.mrb[0].mxu0
        %v977 = vpop.f32.mrb[0].mxu0
        %v978 = vadd.f32 0.0, %v977
        %v979 = vpop.f32.mrb[0].mxu0
        %980 = vdwg.mxu0
        %v981 = vpack.c.bf16 %v810, %v806
        %v982 = vpack.c.bf16 %v812, %v808
        %v983 = vpack.c.bf16 %v922, %v919
        %v984 = vpack.c.bf16 %v820, %v816
        %v985 = vpack.c.bf16 %v822, %v818
        %v986 = vpack.c.bf16 %v930, %v927
        %v987 = vpack.c.bf16 %v830, %v826
        %v988 = vpack.c.bf16 %v832, %v828
        %v989 = vpack.c.bf16 %v938, %v935
        %v990 = vpack.c.bf16 %v840, %v836
        %v991 = vpack.c.bf16 %v842, %v838
        %v992 = vpack.c.bf16 %v946, %v943
        %v993 = vpack.c.bf16 %v850, %v846
        %v994 = vpack.c.bf16 %v852, %v848
        %v995 = vpack.c.bf16 %v954, %v951
        %v996 = vpack.c.bf16 %v860, %v856
        %v997 = vpack.c.bf16 %v862, %v858
        %v998 = vpack.c.bf16 %v962, %v959
        %v999 = vpack.c.bf16 %v870, %v866
        %v1000 = vpack.c.bf16 %v872, %v868
        %v1001 = vpack.c.bf16 %v970, %v967
        %v1002 = vpack.c.bf16 %v880, %v876
        %v1003 = vpack.c.bf16 %v882, %v878
        %v1004 = vpack.c.bf16 %v978, %v975
        %v1029 = vunpack.c.l.b16 %v981
        %v1030 = vunpack.c.l.b16 %v982
        %v1031 = vunpack.c.l.b16 %v983
        %v1032 = vunpack.c.h.b16 %v981
        %v1033 = vunpack.c.h.b16 %v982
        %v1034 = vunpack.c.h.b16 %v983
        %v1035 = vunpack.c.l.b16 %v984
        %v1036 = vunpack.c.l.b16 %v985
        %v1037 = vunpack.c.l.b16 %v986
        %v1038 = vunpack.c.h.b16 %v984
        %v1039 = vunpack.c.h.b16 %v985
        %v1040 = vunpack.c.h.b16 %v986
        %v1041 = vunpack.c.l.b16 %v987
        %v1042 = vunpack.c.l.b16 %v988
        %v1043 = vunpack.c.l.b16 %v989
        %v1044 = vunpack.c.h.b16 %v987
        %v1045 = vunpack.c.h.b16 %v988
        %v1046 = vunpack.c.h.b16 %v989
        %v1047 = vunpack.c.l.b16 %v990
        %v1048 = vunpack.c.l.b16 %v991
        %v1049 = vunpack.c.l.b16 %v992
        %v1050 = vunpack.c.h.b16 %v990
        %v1051 = vunpack.c.h.b16 %v991
        %v1052 = vunpack.c.h.b16 %v992
        %v1053 = vunpack.c.l.b16 %v993
        %v1054 = vunpack.c.l.b16 %v994
        %v1055 = vunpack.c.l.b16 %v995
        %v1056 = vunpack.c.h.b16 %v993
        %v1057 = vunpack.c.h.b16 %v994
        %v1058 = vunpack.c.h.b16 %v995
        %v1059 = vunpack.c.l.b16 %v996
        %v1060 = vunpack.c.l.b16 %v997
        %v1061 = vunpack.c.l.b16 %v998
        %v1062 = vunpack.c.h.b16 %v996
        %v1063 = vunpack.c.h.b16 %v997
        %v1064 = vunpack.c.h.b16 %v998
        %v1065 = vunpack.c.l.b16 %v999
        %v1066 = vunpack.c.l.b16 %v1000
        %v1067 = vunpack.c.l.b16 %v1001
        %v1068 = vunpack.c.h.b16 %v999
        %v1069 = vunpack.c.h.b16 %v1000
        %v1070 = vunpack.c.h.b16 %v1001
        %v1071 = vunpack.c.l.b16 %v1002
        %v1072 = vunpack.c.l.b16 %v1003
        %v1073 = vunpack.c.l.b16 %v1004
        %v1074 = vunpack.c.h.b16 %v1002
        %v1075 = vunpack.c.h.b16 %v1003
        %v1076 = vunpack.c.h.b16 %v1004
        %v1077 = vpack.c.b16 %v1030, %v1029
        %v1078 = vpack.c.b16 %v1031, %v1031
        %v1079 = vpack.c.b16 %v1033, %v1032
        %v1080 = vpack.c.b16 %v1034, %v1034
        %v1081 = vpack.c.b16 %v1036, %v1035
        %v1082 = vpack.c.b16 %v1037, %v1037
        %v1083 = vpack.c.b16 %v1039, %v1038
        %v1084 = vpack.c.b16 %v1040, %v1040
        %v1085 = vpack.c.b16 %v1042, %v1041
        %v1086 = vpack.c.b16 %v1043, %v1043
        %v1087 = vpack.c.b16 %v1045, %v1044
        %v1088 = vpack.c.b16 %v1046, %v1046
        %v1089 = vpack.c.b16 %v1048, %v1047
        %v1090 = vpack.c.b16 %v1049, %v1049
        %v1091 = vpack.c.b16 %v1051, %v1050
        %v1092 = vpack.c.b16 %v1052, %v1052
        %v1093 = vpack.c.b16 %v1054, %v1053
        %v1094 = vpack.c.b16 %v1055, %v1055
        %v1095 = vpack.c.b16 %v1057, %v1056
        %v1096 = vpack.c.b16 %v1058, %v1058
        %v1097 = vpack.c.b16 %v1060, %v1059
        %v1098 = vpack.c.b16 %v1061, %v1061
        %v1099 = vpack.c.b16 %v1063, %v1062
        %v1100 = vpack.c.b16 %v1064, %v1064
        %v1101 = vpack.c.b16 %v1066, %v1065
        %v1102 = vpack.c.b16 %v1067, %v1067
        %v1103 = vpack.c.b16 %v1069, %v1068
        %v1104 = vpack.c.b16 %v1070, %v1070
        %v1105 = vpack.c.b16 %v1072, %v1071
        %v1106 = vpack.c.b16 %v1073, %v1073
        %v1107 = vpack.c.b16 %v1075, %v1074
        %v1108 = vpack.c.b16 %v1076, %v1076
        %1141 = vst [vmem:[%s248] sm:$0xff] %v1077
        %1142 = vst [vmem:[%s248 + $0x8] sm:$0xf] %v1078
        %1143 = vst [vmem:[%s248 + $0xc] sm:$0xff] %v1079
        %1144 = vst [vmem:[%s248 + $0x14] sm:$0xf] %v1080
        %1145 = vst [vmem:[%s248 + $0x18] sm:$0xff] %v1081
        %1146 = vst [vmem:[%s248 + $0x20] sm:$0xf] %v1082
        %1147 = vst [vmem:[%s248 + $0x24] sm:$0xff] %v1083
        %1148 = vst [vmem:[%s248 + $0x2c] sm:$0xf] %v1084
        %1149 = vst [vmem:[%s248 + $0x30] sm:$0xff] %v1085
        %1150 = vst [vmem:[%s248 + $0x38] sm:$0xf] %v1086
        %1151 = vst [vmem:[%s248 + $0x3c] sm:$0xff] %v1087
        %1152 = vst [vmem:[%s248 + $0x44] sm:$0xf] %v1088
        %1153 = vst [vmem:[%s248 + $0x48] sm:$0xff] %v1089
        %1154 = vst [vmem:[%s248 + $0x50] sm:$0xf] %v1090
        %1155 = vst [vmem:[%s248 + $0x54] sm:$0xff] %v1091
        %1156 = vst [vmem:[%s248 + $0x5c] sm:$0xf] %v1092
        %1157 = vst [vmem:[%s248 + $0x60] sm:$0xff] %v1093
        %1158 = vst [vmem:[%s248 + $0x68] sm:$0xf] %v1094
        %1159 = vst [vmem:[%s248 + $0x6c] sm:$0xff] %v1095
        %1160 = vst [vmem:[%s248 + $0x74] sm:$0xf] %v1096
        %1161 = vst [vmem:[%s248 + $0x78] sm:$0xff] %v1097
        %1162 = vst [vmem:[%s248 + $0x80] sm:$0xf] %v1098
        %1163 = vst [vmem:[%s248 + $0x84] sm:$0xff] %v1099
        %1164 = vst [vmem:[%s248 + $0x8c] sm:$0xf] %v1100
        %1165 = vst [vmem:[%s248 + $0x90] sm:$0xff] %v1101
        %1166 = vst [vmem:[%s248 + $0x98] sm:$0xf] %v1102
        %1167 = vst [vmem:[%s248 + $0x9c] sm:$0xff] %v1103
        %1168 = vst [vmem:[%s248 + $0xa4] sm:$0xf] %v1104
        %1169 = vst [vmem:[%s248 + $0xa8] sm:$0xff] %v1105
        %1170 = vst [vmem:[%s248 + $0xb0] sm:$0xf] %v1106
        %1171 = vst [vmem:[%s248 + $0xb4] sm:$0xff] %v1107
        %1172 = vst [vmem:[%s248 + $0xbc] sm:$0xf] %v1108
        %s1173 = sand.u32 %s135, 1
        %s1174 = scalar_lea.sflag [#allocation4], %s1173
        %s1175 = sand.u32 %s135, 1
        %s1176 = smul.addr %s1175, 192
        %s1177 = scalar_lea.vmem [#allocation7], %s1176
        // Predicated region
        $region45: #{tpu_custom_call.1} parent=35 // pred_check
          %p1178 = pneg %p145
        $region46: #{tpu_custom_call.1} parent=35 // pred_check_branch
          %1180 = sbr.rel (%p1178) target = $region48
        $region47: #{tpu_custom_call.1} parent=35 // pred_region
          %s1181 = smul.u32 16, %s27
          %s1183 = ssub.s32 3072, 3072
          %1184 = vsyncadd %s1174, %s1183
          %s1185 = smul.addr %s1181, 3
          %s1186 = smul.addr %s26, 96
          %s1187 = sadd.s32 %s1185, %s1186
          %s1188 = smul.addr %s1187, 64
          %s1189 = scalar_lea.hbm %s4, %s1188
          %s1190 = sshll.u32 %s1177, 4
          %s1191 = int_to_ptr.vmem [resolvable:$true] %s1190
          %1196 = dma.vmem_to_hbm [thread:$0]  %s1191, 3072, %s1189, %s1174, 192, 192, 12
        $region48: #{tpu_custom_call.1} parent=35 // pred_fallthru
          _
      $region36: #{tpu_custom_call.1} parent=5 // pred_fallthru
        _
      %p1197 = scmp.le.s32.totalorder 2, %s17
      // Predicated region
      $region49: #{tpu_custom_call.1} parent=5 // pred_check
        %p1198 = pneg %p1197
      $region50: #{tpu_custom_call.1} parent=5 // pred_check_branch
        %1200 = sbr.rel (%p1198) target = $region52
      $region51: #{tpu_custom_call.1} parent=5 // pred_region
        %s1201 = ssub.s32 %s17, 2
        // Predicated region
        $region53: #{tpu_custom_call.1} parent=51 // pred_check
          %p1202 = pneg %p151
        $region54: #{tpu_custom_call.1} parent=51 // pred_check_branch
          %1204 = sbr.rel (%p1202) target = $region56
        $region55: #{tpu_custom_call.1} parent=51 // pred_region
          %s1205 = sand.u32 %s136, 1
          %s1206 = scalar_lea.sflag [#allocation4], %s1205
          %s1207 = sand.u32 %s136, 1
          %s1208 = smul.addr %s1207, 192
          %s1209 = scalar_lea.vmem [#allocation7], %s1208
          %1210 = dma.done %s1206, 3072
        $region56: #{tpu_custom_call.1} parent=51 // pred_fallthru
          _
      $region52: #{tpu_custom_call.1} parent=5 // pred_fallthru
        _
    $region6: #{tpu_custom_call.1} parent=1 // loop_footer
      %s21 = sadd.s32 1, %s17
    $region7: #{tpu_custom_call.1} parent=1 // loop_footer_branch
      %16 = sbr.rel target = $region3
    $region8: #{tpu_custom_call.1} parent=1 // loop_exit
      _
    %1211 = vsyncpa [#allocation3], 1
    %s1212 = scalar_lea.sflag [#allocation3], 1
    %1213 = vsyncpa %s1212, 1
    %1214 = vsyncpa [#allocation6], 1
    %1215 = vsyncpa [#allocation4], 1
    %s1216 = scalar_lea.sflag [#allocation4], 1
    %1217 = vsyncpa %s1216, 1

</llo_original>
